<compile_context>
chip_gen: v6e
topology: v6e:2x2x1
jax: 0.10.0
libtpu: 0.0.40
codegen_flags: <defaults>
</compile_context>

<pallas_src>
import functools

import numpy as np
import jax
import jax.numpy as jnp
from jax.experimental import pallas as pl
from jax.experimental.pallas import tpu as pltpu

_STRIDES = (2, 1, 2, 1, 2)


# ----------------------------------------------------------------------------
# Fused kernel.  Ref order:  x2d, per-layer operands..., output.
#   stride-2 conv : M_stack(bf16), S_comb(bf16), bias(f32)
#   stride-1 conv : M_stack(bf16), mask_top(f32), mask_bot(f32), bias(f32)
#   linear        : V_stack(bf16), S_lin(bf16), bias(f32)
# ----------------------------------------------------------------------------
def _make_encoder_kernel(conv_kinds):
    def kernel(*refs):
        x_ref, o_ref = refs[0], refs[-1]
        ops = refs[1:-1]
        pos = 0

        a = x_ref[...]                                   # bf16, rows=(b,y), lanes=(x,c)
        for kind in conv_kinds:                          # unrolled at trace time
            m_ref = ops[pos]; pos += 1
            if kind == "s2":
                s_ref = ops[pos]; pos += 1
            else:
                m0_ref = ops[pos]; m2_ref = ops[pos + 1]; pos += 2
            b_ref = ops[pos]; pos += 1

            n = m_ref.shape[1] // 3
            # All three vertical taps in ONE wide Toeplitz matmul (f32 acc).
            t_all = jnp.dot(a, m_ref[...], preferred_element_type=jnp.float32)
            t0, t1, t2 = t_all[:, :n], t_all[:, n:2 * n], t_all[:, 2 * n:]

            if kind == "s1":
                # Vertical taps are +/-1 row shifts: sublane rotate (XLU/VPU),
                # no MXU.  Masks implement the conv's vertical zero padding and
                # image boundaries inside the batch block.  (pltpu.roll would
                # be the native equivalent of these concats.)
                down = jnp.concatenate([t0[-1:], t0[:-1]], axis=0)   # row r <- r-1
                up = jnp.concatenate([t2[1:], t2[:1]], axis=0)       # row r <- r+1
                pre = down * m0_ref[...] + t1 + up * m2_ref[...] + b_ref[...]
            else:
                # Stride-2: merge the 3 per-tap row selections into ONE matmul
                # over the tap-stacked rows (selection is exact in bf16).
                t_cat = jnp.concatenate([t0, t1, t2], axis=0).astype(jnp.bfloat16)
                pre = jnp.dot(s_ref[...], t_cat,
                              preferred_element_type=jnp.float32) + b_ref[...]

            a = jax.nn.gelu(pre, approximate=True).astype(jnp.bfloat16)

        # Flatten + Linear: torch's NCHW flatten order folded into V_stack.
        v_ref, s_ref, lb_ref = ops[pos], ops[pos + 1], ops[pos + 2]
        latent = lb_ref.shape[1]
        n_y = v_ref.shape[1] // latent
        tl = jnp.dot(a, v_ref[...], preferred_element_type=jnp.float32)
        tl_cat = jnp.concatenate(
            [tl[:, y * latent:(y + 1) * latent] for y in range(n_y)],
            axis=0).astype(jnp.bfloat16)
        out = jnp.dot(s_ref[...], tl_cat,
                      preferred_element_type=jnp.float32) + lb_ref[...]
        o_ref[...] = out.astype(o_ref.dtype)

    return kernel


# ----------------------------------------------------------------------------
# Host-side (prepare-time) construction of the structured operands.
# ----------------------------------------------------------------------------
def _toeplitz_stack(wt, w, wo, stride):
    """M[x*Cin+ci, t*N + ox*Cout+co] = wt[t, dx, ci, co], x = stride*ox + dx - 1."""
    _, _, cin, cout = wt.shape
    n = wo * cout
    m = np.zeros((w * cin, 3 * n), np.float32)
    for t in range(3):
        for ox in range(wo):
            for dx in range(3):
                x = stride * ox + dx - 1
                if 0 <= x < w:
                    m[x * cin:(x + 1) * cin,
                      t * n + ox * cout:t * n + (ox + 1) * cout] = wt[t, dx]
    return m


def _stride2_selection(bb, h, ho):
    """S[b*ho+oy, t*(bb*h) + b*h + y] = 1 where y = 2*oy + t - 1, 0 <= y < h."""
    r_in, r_out = bb * h, bb * ho
    s = np.zeros((r_out, 3 * r_in), np.float32)
    for t in range(3):
        for b in range(bb):
            for oy in range(ho):
                y = 2 * oy + t - 1
                if 0 <= y < h:
                    s[b * ho + oy, t * r_in + b * h + y] = 1.0
    return s


def _stride1_masks(bb, h):
    """Zero-padding masks for the +/-1 vertical taps (per image in the block)."""
    r = bb * h
    m0 = np.ones((r, 1), np.float32)      # tap dy=0 invalid at oy == 0
    m2 = np.ones((r, 1), np.float32)      # tap dy=2 invalid at oy == h-1
    for b in range(bb):
        m0[b * h, 0] = 0.0
        m2[b * h + h - 1, 0] = 0.0
    return m0, m2


def _linear_fold(lin_w, c, ho, wo, bb):
    """Fold torch's NCHW flatten + Linear into V_stack (tap-stacked over y)."""
    latent = lin_w.shape[1]
    v = np.zeros((wo * c, ho * latent), np.float32)
    for y in range(ho):
        for x in range(wo):
            for ci in range(c):
                v[x * c + ci, y * latent:(y + 1) * latent] = \
                    lin_w[ci * ho * wo + y * wo + x, :]
    r = bb * ho
    s = np.zeros((bb, ho * r), np.float32)
    for b in range(bb):
        for y in range(ho):
            s[b, y * r + b * ho + y] = 1.0
    return v, s


def prepare_encoder_operands(params, block_batch, num_input_channels, c_hid,
                             height=32, width=32):
    """Built once per parameter set + batch-block size (NOT per forward pass)."""
    bb = block_batch
    cin_pad = -(-num_input_channels // 4) * 4       # pad layer-0 Cin (3 -> 4)
    ops, kinds = [], []
    h, w = height, width
    for i, s in enumerate(_STRIDES):
        wt = np.asarray(params[f"conv{i}_w"], np.float32)     # (3,3,Cin,Cout)
        bi = np.asarray(params[f"conv{i}_b"], np.float32)     # (Cout,)
        if i == 0 and cin_pad != wt.shape[2]:
            pad = np.zeros(wt.shape[:2] + (cin_pad - wt.shape[2], wt.shape[3]),
                           np.float32)
            wt = np.concatenate([wt, pad], axis=2)
        ho = (h - 1) // s + 1                                  # padding=1, k=3
        wo = (w - 1) // s + 1
        cin = wt.shape[2]
        m = _toeplitz_stack(wt, w, wo, s)                      # (w*cin, 3*wo*cout)
        brow = np.tile(bi, wo)[None, :]                        # (1, wo*cout)
        ops.append(jnp.asarray(m, jnp.bfloat16))
        if s == 2:
            kinds.append("s2")
            ops.append(jnp.asarray(_stride2_selection(bb, h, ho), jnp.bfloat16))
        else:
            kinds.append("s1")
            m0, m2 = _stride1_masks(bb, h)
            ops.append(jnp.asarray(m0, jnp.float32))
            ops.append(jnp.asarray(m2, jnp.float32))
        ops.append(jnp.asarray(brow, jnp.float32))
        h, w = ho, wo
    c_lat = 2 * c_hid
    lin_w = np.asarray(params["lin_w"], np.float32)            # (c_lat*h*w, latent)
    lin_b = np.asarray(params["lin_b"], np.float32)
    v, s_lin = _linear_fold(lin_w, c_lat, h, w, bb)
    ops += [jnp.asarray(v, jnp.bfloat16),
            jnp.asarray(s_lin, jnp.bfloat16),
            jnp.asarray(lin_b[None, :], jnp.float32)]
    return ops, tuple(kinds), cin_pad


# ----------------------------------------------------------------------------
# Forward pass (single fused pallas_call, grid over batch blocks).
# ----------------------------------------------------------------------------
def _cost_estimate(kinds, operands, x2d, out_shape, rows0, steps):
    flops, trans, idx, rows = 0, 0, 0, rows0
    for kind in kinds:
        m = operands[idx]; idx += 1
        k, n3 = int(m.shape[0]), int(m.shape[1])
        n = n3 // 3
        flops += 2 * rows * k * n3
        if kind == "s2":
            s = operands[idx]; idx += 1
            r_out = int(s.shape[0])
            flops += 2 * r_out * (3 * rows) * n
            rows = r_out
        else:
            idx += 2                                    # masks
        idx += 1                                        # bias
        trans += rows * n                               # one tanh per GELU elem
    v, s_lin, lb = operands[idx], operands[idx + 1], operands[idx + 2]
    latent = int(lb.shape[1])
    flops += 2 * rows * int(v.shape[0]) * int(v.shape[1])
    flops += 2 * int(s_lin.shape[0]) * int(s_lin.shape[1]) * latent
    bytes_accessed = (x2d.size * x2d.dtype.itemsize
                      + sum(int(o.size) * o.dtype.itemsize for o in operands)
                      + int(np.prod(out_shape.shape)) * 4)
    return pl.CostEstimate(flops=int(flops * steps),
                           transcendentals=int(trans * steps),
                           bytes_accessed=int(bytes_accessed))


def encoder_forward(x_nchw, operands, *, kinds, cin_pad, block_batch):
    """x_nchw: (B, Cin, 32, 32); operands from prepare_encoder_operands."""
    B, cin, H, W = x_nchw.shape
    bb = block_batch
    assert B % bb == 0, "batch must be a multiple of the batch block"
    latent = operands[-1].shape[-1]

    # NCHW -> NHWC -> pad Cin to a lane-friendly multiple -> (B*H, W*Cin_pad).
    x = jnp.transpose(x_nchw, (0, 2, 3, 1))
    if cin_pad != cin:
        x = jnp.pad(x, ((0, 0), (0, 0), (0, 0), (0, cin_pad - cin)))
    x2d = x.reshape(B * H, W * cin_pad).astype(jnp.bfloat16)

    steps = B // bb
    rows_blk = bb * H
    in_specs = [pl.BlockSpec((rows_blk, W * cin_pad), lambda i: (i, 0))]
    in_specs += [pl.BlockSpec(op.shape, lambda i: (0, 0)) for op in operands]
    out_shape = jax.ShapeDtypeStruct((B, latent), jnp.float32)

    return pl.pallas_call(
        _make_encoder_kernel(kinds),
        out_shape=out_shape,
        grid=(steps,),
        in_specs=in_specs,
        out_specs=pl.BlockSpec((bb, latent), lambda i: (i, 0)),
        compiler_params=pltpu.CompilerParams(
            dimension_semantics=("parallel",)),
        cost_estimate=_cost_estimate(kinds, operands, x2d, out_shape,
                                     rows_blk, steps),
    )(x2d, *operands)


# ----------------------------------------------------------------------------
# Parameters (synthetic, deterministic) + pure-JAX reference for validation.
# ----------------------------------------------------------------------------
def init_encoder_params(key, num_input_channels, c_hid, latent_dim,
                        dtype=jnp.float32):
    conv_dims = [
        (num_input_channels, c_hid),   # stride 2: 32 -> 16
        (c_hid, c_hid),                # stride 1
        (c_hid, 2 * c_hid),            # stride 2: 16 -> 8
        (2 * c_hid, 2 * c_hid),        # stride 1
        (2 * c_hid, 2 * c_hid),        # stride 2: 8 -> 4
    ]
    params = {}
    for i, (cin, cout) in enumerate(conv_dims):
        key, kw, kb = jax.random.split(key, 3)
        fan_in = 9 * cin
        params[f"conv{i}_w"] = (
            jax.random.normal(kw, (3, 3, cin, cout), dtype) / jnp.sqrt(fan_in))
        params[f"conv{i}_b"] = 0.01 * jax.random.normal(kb, (cout,), dtype)
    in_features = 2 * 16 * c_hid
    key, kw, kb = jax.random.split(key, 3)
    params["lin_w"] = (
        jax.random.normal(kw, (in_features, latent_dim), dtype)
        / jnp.sqrt(in_features))
    params["lin_b"] = 0.01 * jax.random.normal(kb, (latent_dim,), dtype)
    return params


def encoder_reference(x_nchw, params):
    """Pure-JAX reference (same semantics: convs, GELU, NCHW flatten, Linear)."""
    x = jnp.transpose(x_nchw, (0, 2, 3, 1))
    for i, s in enumerate(_STRIDES):
        x = jax.lax.conv_general_dilated(
            x, params[f"conv{i}_w"], window_strides=(s, s),
            padding=((1, 1), (1, 1)),
            dimension_numbers=("NHWC", "HWIO", "NHWC"))
        x = jax.nn.gelu(x + params[f"conv{i}_b"], approximate=True)
    b = x.shape[0]
    flat = jnp.transpose(x, (0, 3, 1, 2)).reshape(b, -1)
    return flat @ params["lin_w"] + params["lin_b"]


if __name__ == "__main__":
    key = jax.random.PRNGKey(0)
    num_input_channels = 3
    base_channel_size = 8          # c_hid
    latent_dim = 16
    batch = 2

    k_x, k_p = jax.random.split(key)
    # Spatial 32x32 is implied by Linear(2 * 16 * c_hid, latent_dim).
    x = jax.random.normal(k_x, (batch, num_input_channels, 32, 32), jnp.float32)
    params = init_encoder_params(k_p, num_input_channels, base_channel_size,
                                 latent_dim)

    # Batch block: tiny batches run in one grid step; large (multiple-of-8)
    # batches shard across grid steps (and v7x's 2 TensorCores).
    block_batch = batch if (batch <= 8 or batch % 8 != 0) else 8
    operands, kinds, cin_pad = prepare_encoder_operands(
        params, block_batch, num_input_channels, base_channel_size)

    fwd = jax.jit(functools.partial(encoder_forward, kinds=kinds,
                                    cin_pad=cin_pad, block_batch=block_batch))
    z = jax.block_until_ready(fwd(x, operands))

    assert z.shape == (batch, latent_dim), z.shape
    assert bool(jnp.all(jnp.isfinite(z)))

    # Numerical check against the pure-JAX reference (bf16 MXU => loose tol).
    z_ref = jax.block_until_ready(encoder_reference(x, params))
    assert bool(jnp.allclose(z, z_ref, rtol=5e-2, atol=5e-2)), (
        float(jnp.max(jnp.abs(z - z_ref))))

    print("KERNEL_OK")
</pallas_src>

<mosaic_0001>
module attributes {stable_mosaic.version = 11 : i64} {
  func.func @kernel(%arg0: i32, %arg1: memref<64x128xbf16, #tpu.memory_space<vmem>>, %arg2: memref<128x384xbf16, #tpu.memory_space<vmem>>, %arg3: memref<32x192xbf16, #tpu.memory_space<vmem>>, %arg4: memref<1x128xf32, #tpu.memory_space<vmem>>, %arg5: memref<128x384xbf16, #tpu.memory_space<vmem>>, %arg6: memref<32x1xf32, #tpu.memory_space<vmem>>, %arg7: memref<32x1xf32, #tpu.memory_space<vmem>>, %arg8: memref<1x128xf32, #tpu.memory_space<vmem>>, %arg9: memref<128x384xbf16, #tpu.memory_space<vmem>>, %arg10: memref<16x96xbf16, #tpu.memory_space<vmem>>, %arg11: memref<1x128xf32, #tpu.memory_space<vmem>>, %arg12: memref<128x384xbf16, #tpu.memory_space<vmem>>, %arg13: memref<16x1xf32, #tpu.memory_space<vmem>>, %arg14: memref<16x1xf32, #tpu.memory_space<vmem>>, %arg15: memref<1x128xf32, #tpu.memory_space<vmem>>, %arg16: memref<128x192xbf16, #tpu.memory_space<vmem>>, %arg17: memref<8x48xbf16, #tpu.memory_space<vmem>>, %arg18: memref<1x64xf32, #tpu.memory_space<vmem>>, %arg19: memref<64x64xbf16, #tpu.memory_space<vmem>>, %arg20: memref<2x32xbf16, #tpu.memory_space<vmem>>, %arg21: memref<1x16xf32, #tpu.memory_space<vmem>>, %arg22: memref<2x16xf32, #tpu.memory_space<vmem>>) attributes {dimension_semantics = [#tpu.dimension_semantics<parallel>], iteration_bounds = array<i64: 1>, scalar_prefetch = 0 : i64, scratch_operands = 0 : i64, tpu.core_type = #tpu.core_type<tc>, window_params = [{transform_indices = @transform_0, window_bounds = array<i64: 64, 128>}, {pipeline_mode = #tpu.pipeline_mode<synchronous>, transform_indices = @transform_1, window_bounds = array<i64: 128, 384>}, {pipeline_mode = #tpu.pipeline_mode<synchronous>, transform_indices = @transform_2, window_bounds = array<i64: 32, 192>}, {pipeline_mode = #tpu.pipeline_mode<synchronous>, transform_indices = @transform_3, window_bounds = array<i64: 1, 128>}, {pipeline_mode = #tpu.pipeline_mode<synchronous>, transform_indices = @transform_4, window_bounds = array<i64: 128, 384>}, {pipeline_mode = #tpu.pipeline_mode<synchronous>, transform_indices = @transform_5, window_bounds = array<i64: 32, 1>}, {pipeline_mode = #tpu.pipeline_mode<synchronous>, transform_indices = @transform_6, window_bounds = array<i64: 32, 1>}, {pipeline_mode = #tpu.pipeline_mode<synchronous>, transform_indices = @transform_7, window_bounds = array<i64: 1, 128>}, {pipeline_mode = #tpu.pipeline_mode<synchronous>, transform_indices = @transform_8, window_bounds = array<i64: 128, 384>}, {pipeline_mode = #tpu.pipeline_mode<synchronous>, transform_indices = @transform_9, window_bounds = array<i64: 16, 96>}, {pipeline_mode = #tpu.pipeline_mode<synchronous>, transform_indices = @transform_10, window_bounds = array<i64: 1, 128>}, {pipeline_mode = #tpu.pipeline_mode<synchronous>, transform_indices = @transform_11, window_bounds = array<i64: 128, 384>}, {pipeline_mode = #tpu.pipeline_mode<synchronous>, transform_indices = @transform_12, window_bounds = array<i64: 16, 1>}, {pipeline_mode = #tpu.pipeline_mode<synchronous>, transform_indices = @transform_13, window_bounds = array<i64: 16, 1>}, {pipeline_mode = #tpu.pipeline_mode<synchronous>, transform_indices = @transform_14, window_bounds = array<i64: 1, 128>}, {pipeline_mode = #tpu.pipeline_mode<synchronous>, transform_indices = @transform_15, window_bounds = array<i64: 128, 192>}, {pipeline_mode = #tpu.pipeline_mode<synchronous>, transform_indices = @transform_16, window_bounds = array<i64: 8, 48>}, {pipeline_mode = #tpu.pipeline_mode<synchronous>, transform_indices = @transform_17, window_bounds = array<i64: 1, 64>}, {pipeline_mode = #tpu.pipeline_mode<synchronous>, transform_indices = @transform_18, window_bounds = array<i64: 64, 64>}, {pipeline_mode = #tpu.pipeline_mode<synchronous>, transform_indices = @transform_19, window_bounds = array<i64: 2, 32>}, {pipeline_mode = #tpu.pipeline_mode<synchronous>, transform_indices = @transform_20, window_bounds = array<i64: 1, 16>}, {transform_indices = @transform_21, window_bounds = array<i64: 2, 16>}]} {
    %c0 = arith.constant 0 : index
    %c0_0 = arith.constant 0 : index
    %0 = vector.load %arg1[%c0, %c0_0] : memref<64x128xbf16, #tpu.memory_space<vmem>>, vector<64x128xbf16>
    %c0_1 = arith.constant 0 : index
    %c0_2 = arith.constant 0 : index
    %1 = vector.load %arg2[%c0_1, %c0_2] : memref<128x384xbf16, #tpu.memory_space<vmem>>, vector<128x384xbf16>
    %cst = arith.constant dense<0.000000e+00> : vector<64x384xf32>
    %2 = tpu.matmul %0, %1, %cst {dimension_numbers = #tpu.dot_dimension_numbers<[1], [0], [0], [1], [0, 0, 1, 1], [], []>} : vector<64x128xbf16>, vector<128x384xbf16>, vector<64x384xf32> -> vector<64x384xf32>
    %3 = vector.extract_strided_slice %2 {offsets = [0, 0], sizes = [64, 128], strides = [1, 1]} : vector<64x384xf32> to vector<64x128xf32>
    %4 = vector.extract_strided_slice %2 {offsets = [0, 128], sizes = [64, 128], strides = [1, 1]} : vector<64x384xf32> to vector<64x128xf32>
    %5 = vector.extract_strided_slice %2 {offsets = [0, 256], sizes = [64, 128], strides = [1, 1]} : vector<64x384xf32> to vector<64x128xf32>
    %6 = tpu.concatenate %3, %4, %5 in 0 : vector<64x128xf32>, vector<64x128xf32>, vector<64x128xf32> -> vector<192x128xf32>
    %7 = arith.truncf %6 : vector<192x128xf32> to vector<192x128xbf16>
    %c0_3 = arith.constant 0 : index
    %c0_4 = arith.constant 0 : index
    %8 = vector.load %arg3[%c0_3, %c0_4] : memref<32x192xbf16, #tpu.memory_space<vmem>>, vector<32x192xbf16>
    %cst_5 = arith.constant dense<0.000000e+00> : vector<32x128xf32>
    %9 = tpu.matmul %8, %7, %cst_5 {dimension_numbers = #tpu.dot_dimension_numbers<[1], [0], [0], [1], [0, 0, 1, 1], [], []>} : vector<32x192xbf16>, vector<192x128xbf16>, vector<32x128xf32> -> vector<32x128xf32>
    %c0_6 = arith.constant 0 : index
    %c0_7 = arith.constant 0 : index
    %10 = vector.load %arg4[%c0_6, %c0_7] : memref<1x128xf32, #tpu.memory_space<vmem>>, vector<1x128xf32>
    %11 = vector.broadcast %10 : vector<1x128xf32> to vector<32x128xf32>
    %12 = arith.addf %9, %11 : vector<32x128xf32>
    %13 = arith.mulf %12, %12 : vector<32x128xf32>
    %14 = arith.mulf %12, %13 : vector<32x128xf32>
    %cst_8 = arith.constant 4.471500e-02 : f32
    %15 = vector.broadcast %cst_8 : f32 to vector<32x128xf32>
    %16 = arith.mulf %15, %14 : vector<32x128xf32>
    %17 = arith.addf %12, %16 : vector<32x128xf32>
    %cst_9 = arith.constant 0.797884583 : f32
    %18 = vector.broadcast %cst_9 : f32 to vector<32x128xf32>
    %19 = arith.mulf %18, %17 : vector<32x128xf32>
    %20 = math.tanh %19 : vector<32x128xf32>
    %cst_10 = arith.constant 1.000000e+00 : f32
    %21 = vector.broadcast %cst_10 : f32 to vector<32x128xf32>
    %22 = arith.addf %21, %20 : vector<32x128xf32>
    %cst_11 = arith.constant 5.000000e-01 : f32
    %23 = vector.broadcast %cst_11 : f32 to vector<32x128xf32>
    %24 = arith.mulf %23, %22 : vector<32x128xf32>
    %25 = arith.mulf %12, %24 : vector<32x128xf32>
    %26 = arith.truncf %25 : vector<32x128xf32> to vector<32x128xbf16>
    %c0_12 = arith.constant 0 : index
    %c0_13 = arith.constant 0 : index
    %27 = vector.load %arg5[%c0_12, %c0_13] : memref<128x384xbf16, #tpu.memory_space<vmem>>, vector<128x384xbf16>
    %cst_14 = arith.constant dense<0.000000e+00> : vector<32x384xf32>
    %28 = tpu.matmul %26, %27, %cst_14 {dimension_numbers = #tpu.dot_dimension_numbers<[1], [0], [0], [1], [0, 0, 1, 1], [], []>} : vector<32x128xbf16>, vector<128x384xbf16>, vector<32x384xf32> -> vector<32x384xf32>
    %29 = vector.extract_strided_slice %28 {offsets = [0, 0], sizes = [32, 128], strides = [1, 1]} : vector<32x384xf32> to vector<32x128xf32>
    %30 = vector.extract_strided_slice %28 {offsets = [0, 128], sizes = [32, 128], strides = [1, 1]} : vector<32x384xf32> to vector<32x128xf32>
    %31 = vector.extract_strided_slice %28 {offsets = [0, 256], sizes = [32, 128], strides = [1, 1]} : vector<32x384xf32> to vector<32x128xf32>
    %32 = vector.extract_strided_slice %29 {offsets = [31, 0], sizes = [1, 128], strides = [1, 1]} : vector<32x128xf32> to vector<1x128xf32>
    %33 = vector.extract_strided_slice %29 {offsets = [0, 0], sizes = [31, 128], strides = [1, 1]} : vector<32x128xf32> to vector<31x128xf32>
    %34 = tpu.concatenate %32, %33 in 0 : vector<1x128xf32>, vector<31x128xf32> -> vector<32x128xf32>
    %35 = vector.extract_strided_slice %31 {offsets = [1, 0], sizes = [31, 128], strides = [1, 1]} : vector<32x128xf32> to vector<31x128xf32>
    %36 = vector.extract_strided_slice %31 {offsets = [0, 0], sizes = [1, 128], strides = [1, 1]} : vector<32x128xf32> to vector<1x128xf32>
    %37 = tpu.concatenate %35, %36 in 0 : vector<31x128xf32>, vector<1x128xf32> -> vector<32x128xf32>
    %c0_15 = arith.constant 0 : index
    %c0_16 = arith.constant 0 : index
    %38 = vector.load %arg6[%c0_15, %c0_16] : memref<32x1xf32, #tpu.memory_space<vmem>>, vector<32x1xf32>
    %39 = vector.broadcast %38 : vector<32x1xf32> to vector<32x128xf32>
    %40 = arith.mulf %34, %39 : vector<32x128xf32>
    %41 = arith.addf %40, %30 : vector<32x128xf32>
    %c0_17 = arith.constant 0 : index
    %c0_18 = arith.constant 0 : index
    %42 = vector.load %arg7[%c0_17, %c0_18] : memref<32x1xf32, #tpu.memory_space<vmem>>, vector<32x1xf32>
    %43 = vector.broadcast %42 : vector<32x1xf32> to vector<32x128xf32>
    %44 = arith.mulf %37, %43 : vector<32x128xf32>
    %45 = arith.addf %41, %44 : vector<32x128xf32>
    %c0_19 = arith.constant 0 : index
    %c0_20 = arith.constant 0 : index
    %46 = vector.load %arg8[%c0_19, %c0_20] : memref<1x128xf32, #tpu.memory_space<vmem>>, vector<1x128xf32>
    %47 = vector.broadcast %46 : vector<1x128xf32> to vector<32x128xf32>
    %48 = arith.addf %45, %47 : vector<32x128xf32>
    %49 = arith.mulf %48, %48 : vector<32x128xf32>
    %50 = arith.mulf %48, %49 : vector<32x128xf32>
    %cst_21 = arith.constant 4.471500e-02 : f32
    %51 = vector.broadcast %cst_21 : f32 to vector<32x128xf32>
    %52 = arith.mulf %51, %50 : vector<32x128xf32>
    %53 = arith.addf %48, %52 : vector<32x128xf32>
    %cst_22 = arith.constant 0.797884583 : f32
    %54 = vector.broadcast %cst_22 : f32 to vector<32x128xf32>
    %55 = arith.mulf %54, %53 : vector<32x128xf32>
    %56 = math.tanh %55 : vector<32x128xf32>
    %cst_23 = arith.constant 1.000000e+00 : f32
    %57 = vector.broadcast %cst_23 : f32 to vector<32x128xf32>
    %58 = arith.addf %57, %56 : vector<32x128xf32>
    %cst_24 = arith.constant 5.000000e-01 : f32
    %59 = vector.broadcast %cst_24 : f32 to vector<32x128xf32>
    %60 = arith.mulf %59, %58 : vector<32x128xf32>
    %61 = arith.mulf %48, %60 : vector<32x128xf32>
    %62 = arith.truncf %61 : vector<32x128xf32> to vector<32x128xbf16>
    %c0_25 = arith.constant 0 : index
    %c0_26 = arith.constant 0 : index
    %63 = vector.load %arg9[%c0_25, %c0_26] : memref<128x384xbf16, #tpu.memory_space<vmem>>, vector<128x384xbf16>
    %cst_27 = arith.constant dense<0.000000e+00> : vector<32x384xf32>
    %64 = tpu.matmul %62, %63, %cst_27 {dimension_numbers = #tpu.dot_dimension_numbers<[1], [0], [0], [1], [0, 0, 1, 1], [], []>} : vector<32x128xbf16>, vector<128x384xbf16>, vector<32x384xf32> -> vector<32x384xf32>
    %65 = vector.extract_strided_slice %64 {offsets = [0, 0], sizes = [32, 128], strides = [1, 1]} : vector<32x384xf32> to vector<32x128xf32>
    %66 = vector.extract_strided_slice %64 {offsets = [0, 128], sizes = [32, 128], strides = [1, 1]} : vector<32x384xf32> to vector<32x128xf32>
    %67 = vector.extract_strided_slice %64 {offsets = [0, 256], sizes = [32, 128], strides = [1, 1]} : vector<32x384xf32> to vector<32x128xf32>
    %68 = tpu.concatenate %65, %66, %67 in 0 : vector<32x128xf32>, vector<32x128xf32>, vector<32x128xf32> -> vector<96x128xf32>
    %69 = arith.truncf %68 : vector<96x128xf32> to vector<96x128xbf16>
    %c0_28 = arith.constant 0 : index
    %c0_29 = arith.constant 0 : index
    %70 = vector.load %arg10[%c0_28, %c0_29] : memref<16x96xbf16, #tpu.memory_space<vmem>>, vector<16x96xbf16>
    %cst_30 = arith.constant dense<0.000000e+00> : vector<16x128xf32>
    %71 = tpu.matmul %70, %69, %cst_30 {dimension_numbers = #tpu.dot_dimension_numbers<[1], [0], [0], [1], [0, 0, 1, 1], [], []>} : vector<16x96xbf16>, vector<96x128xbf16>, vector<16x128xf32> -> vector<16x128xf32>
    %c0_31 = arith.constant 0 : index
    %c0_32 = arith.constant 0 : index
    %72 = vector.load %arg11[%c0_31, %c0_32] : memref<1x128xf32, #tpu.memory_space<vmem>>, vector<1x128xf32>
    %73 = vector.broadcast %72 : vector<1x128xf32> to vector<16x128xf32>
    %74 = arith.addf %71, %73 : vector<16x128xf32>
    %75 = arith.mulf %74, %74 : vector<16x128xf32>
    %76 = arith.mulf %74, %75 : vector<16x128xf32>
    %cst_33 = arith.constant 4.471500e-02 : f32
    %77 = vector.broadcast %cst_33 : f32 to vector<16x128xf32>
    %78 = arith.mulf %77, %76 : vector<16x128xf32>
    %79 = arith.addf %74, %78 : vector<16x128xf32>
    %cst_34 = arith.constant 0.797884583 : f32
    %80 = vector.broadcast %cst_34 : f32 to vector<16x128xf32>
    %81 = arith.mulf %80, %79 : vector<16x128xf32>
    %82 = math.tanh %81 : vector<16x128xf32>
    %cst_35 = arith.constant 1.000000e+00 : f32
    %83 = vector.broadcast %cst_35 : f32 to vector<16x128xf32>
    %84 = arith.addf %83, %82 : vector<16x128xf32>
    %cst_36 = arith.constant 5.000000e-01 : f32
    %85 = vector.broadcast %cst_36 : f32 to vector<16x128xf32>
    %86 = arith.mulf %85, %84 : vector<16x128xf32>
    %87 = arith.mulf %74, %86 : vector<16x128xf32>
    %88 = arith.truncf %87 : vector<16x128xf32> to vector<16x128xbf16>
    %c0_37 = arith.constant 0 : index
    %c0_38 = arith.constant 0 : index
    %89 = vector.load %arg12[%c0_37, %c0_38] : memref<128x384xbf16, #tpu.memory_space<vmem>>, vector<128x384xbf16>
    %cst_39 = arith.constant dense<0.000000e+00> : vector<16x384xf32>
    %90 = tpu.matmul %88, %89, %cst_39 {dimension_numbers = #tpu.dot_dimension_numbers<[1], [0], [0], [1], [0, 0, 1, 1], [], []>} : vector<16x128xbf16>, vector<128x384xbf16>, vector<16x384xf32> -> vector<16x384xf32>
    %91 = vector.extract_strided_slice %90 {offsets = [0, 0], sizes = [16, 128], strides = [1, 1]} : vector<16x384xf32> to vector<16x128xf32>
    %92 = vector.extract_strided_slice %90 {offsets = [0, 128], sizes = [16, 128], strides = [1, 1]} : vector<16x384xf32> to vector<16x128xf32>
    %93 = vector.extract_strided_slice %90 {offsets = [0, 256], sizes = [16, 128], strides = [1, 1]} : vector<16x384xf32> to vector<16x128xf32>
    %94 = vector.extract_strided_slice %91 {offsets = [15, 0], sizes = [1, 128], strides = [1, 1]} : vector<16x128xf32> to vector<1x128xf32>
    %95 = vector.extract_strided_slice %91 {offsets = [0, 0], sizes = [15, 128], strides = [1, 1]} : vector<16x128xf32> to vector<15x128xf32>
    %96 = tpu.concatenate %94, %95 in 0 : vector<1x128xf32>, vector<15x128xf32> -> vector<16x128xf32>
    %97 = vector.extract_strided_slice %93 {offsets = [1, 0], sizes = [15, 128], strides = [1, 1]} : vector<16x128xf32> to vector<15x128xf32>
    %98 = vector.extract_strided_slice %93 {offsets = [0, 0], sizes = [1, 128], strides = [1, 1]} : vector<16x128xf32> to vector<1x128xf32>
    %99 = tpu.concatenate %97, %98 in 0 : vector<15x128xf32>, vector<1x128xf32> -> vector<16x128xf32>
    %c0_40 = arith.constant 0 : index
    %c0_41 = arith.constant 0 : index
    %100 = vector.load %arg13[%c0_40, %c0_41] : memref<16x1xf32, #tpu.memory_space<vmem>>, vector<16x1xf32>
    %101 = vector.broadcast %100 : vector<16x1xf32> to vector<16x128xf32>
    %102 = arith.mulf %96, %101 : vector<16x128xf32>
    %103 = arith.addf %102, %92 : vector<16x128xf32>
    %c0_42 = arith.constant 0 : index
    %c0_43 = arith.constant 0 : index
    %104 = vector.load %arg14[%c0_42, %c0_43] : memref<16x1xf32, #tpu.memory_space<vmem>>, vector<16x1xf32>
    %105 = vector.broadcast %104 : vector<16x1xf32> to vector<16x128xf32>
    %106 = arith.mulf %99, %105 : vector<16x128xf32>
    %107 = arith.addf %103, %106 : vector<16x128xf32>
    %c0_44 = arith.constant 0 : index
    %c0_45 = arith.constant 0 : index
    %108 = vector.load %arg15[%c0_44, %c0_45] : memref<1x128xf32, #tpu.memory_space<vmem>>, vector<1x128xf32>
    %109 = vector.broadcast %108 : vector<1x128xf32> to vector<16x128xf32>
    %110 = arith.addf %107, %109 : vector<16x128xf32>
    %111 = arith.mulf %110, %110 : vector<16x128xf32>
    %112 = arith.mulf %110, %111 : vector<16x128xf32>
    %cst_46 = arith.constant 4.471500e-02 : f32
    %113 = vector.broadcast %cst_46 : f32 to vector<16x128xf32>
    %114 = arith.mulf %113, %112 : vector<16x128xf32>
    %115 = arith.addf %110, %114 : vector<16x128xf32>
    %cst_47 = arith.constant 0.797884583 : f32
    %116 = vector.broadcast %cst_47 : f32 to vector<16x128xf32>
    %117 = arith.mulf %116, %115 : vector<16x128xf32>
    %118 = math.tanh %117 : vector<16x128xf32>
    %cst_48 = arith.constant 1.000000e+00 : f32
    %119 = vector.broadcast %cst_48 : f32 to vector<16x128xf32>
    %120 = arith.addf %119, %118 : vector<16x128xf32>
    %cst_49 = arith.constant 5.000000e-01 : f32
    %121 = vector.broadcast %cst_49 : f32 to vector<16x128xf32>
    %122 = arith.mulf %121, %120 : vector<16x128xf32>
    %123 = arith.mulf %110, %122 : vector<16x128xf32>
    %124 = arith.truncf %123 : vector<16x128xf32> to vector<16x128xbf16>
    %c0_50 = arith.constant 0 : index
    %c0_51 = arith.constant 0 : index
    %125 = vector.load %arg16[%c0_50, %c0_51] : memref<128x192xbf16, #tpu.memory_space<vmem>>, vector<128x192xbf16>
    %cst_52 = arith.constant dense<0.000000e+00> : vector<16x192xf32>
    %126 = tpu.matmul %124, %125, %cst_52 {dimension_numbers = #tpu.dot_dimension_numbers<[1], [0], [0], [1], [0, 0, 1, 1], [], []>} : vector<16x128xbf16>, vector<128x192xbf16>, vector<16x192xf32> -> vector<16x192xf32>
    %127 = vector.extract_strided_slice %126 {offsets = [0, 0], sizes = [16, 64], strides = [1, 1]} : vector<16x192xf32> to vector<16x64xf32>
    %128 = vector.extract_strided_slice %126 {offsets = [0, 64], sizes = [16, 64], strides = [1, 1]} : vector<16x192xf32> to vector<16x64xf32>
    %129 = vector.extract_strided_slice %126 {offsets = [0, 128], sizes = [16, 64], strides = [1, 1]} : vector<16x192xf32> to vector<16x64xf32>
    %130 = tpu.concatenate %127, %128, %129 in 0 : vector<16x64xf32>, vector<16x64xf32>, vector<16x64xf32> -> vector<48x64xf32>
    %131 = arith.truncf %130 : vector<48x64xf32> to vector<48x64xbf16>
    %c0_53 = arith.constant 0 : index
    %c0_54 = arith.constant 0 : index
    %132 = vector.load %arg17[%c0_53, %c0_54] : memref<8x48xbf16, #tpu.memory_space<vmem>>, vector<8x48xbf16>
    %cst_55 = arith.constant dense<0.000000e+00> : vector<8x64xf32>
    %133 = tpu.matmul %132, %131, %cst_55 {dimension_numbers = #tpu.dot_dimension_numbers<[1], [0], [0], [1], [0, 0, 1, 1], [], []>} : vector<8x48xbf16>, vector<48x64xbf16>, vector<8x64xf32> -> vector<8x64xf32>
    %c0_56 = arith.constant 0 : index
    %c0_57 = arith.constant 0 : index
    %134 = vector.load %arg18[%c0_56, %c0_57] : memref<1x64xf32, #tpu.memory_space<vmem>>, vector<1x64xf32>
    %135 = vector.broadcast %134 : vector<1x64xf32> to vector<8x64xf32>
    %136 = arith.addf %133, %135 : vector<8x64xf32>
    %137 = arith.mulf %136, %136 : vector<8x64xf32>
    %138 = arith.mulf %136, %137 : vector<8x64xf32>
    %cst_58 = arith.constant 4.471500e-02 : f32
    %139 = vector.broadcast %cst_58 : f32 to vector<8x64xf32>
    %140 = arith.mulf %139, %138 : vector<8x64xf32>
    %141 = arith.addf %136, %140 : vector<8x64xf32>
    %cst_59 = arith.constant 0.797884583 : f32
    %142 = vector.broadcast %cst_59 : f32 to vector<8x64xf32>
    %143 = arith.mulf %142, %141 : vector<8x64xf32>
    %144 = math.tanh %143 : vector<8x64xf32>
    %cst_60 = arith.constant 1.000000e+00 : f32
    %145 = vector.broadcast %cst_60 : f32 to vector<8x64xf32>
    %146 = arith.addf %145, %144 : vector<8x64xf32>
    %cst_61 = arith.constant 5.000000e-01 : f32
    %147 = vector.broadcast %cst_61 : f32 to vector<8x64xf32>
    %148 = arith.mulf %147, %146 : vector<8x64xf32>
    %149 = arith.mulf %136, %148 : vector<8x64xf32>
    %150 = arith.truncf %149 : vector<8x64xf32> to vector<8x64xbf16>
    %c0_62 = arith.constant 0 : index
    %c0_63 = arith.constant 0 : index
    %151 = vector.load %arg19[%c0_62, %c0_63] : memref<64x64xbf16, #tpu.memory_space<vmem>>, vector<64x64xbf16>
    %cst_64 = arith.constant dense<0.000000e+00> : vector<8x64xf32>
    %152 = tpu.matmul %150, %151, %cst_64 {dimension_numbers = #tpu.dot_dimension_numbers<[1], [0], [0], [1], [0, 0, 1, 1], [], []>} : vector<8x64xbf16>, vector<64x64xbf16>, vector<8x64xf32> -> vector<8x64xf32>
    %153 = vector.extract_strided_slice %152 {offsets = [0, 0], sizes = [8, 16], strides = [1, 1]} : vector<8x64xf32> to vector<8x16xf32>
    %154 = vector.extract_strided_slice %152 {offsets = [0, 16], sizes = [8, 16], strides = [1, 1]} : vector<8x64xf32> to vector<8x16xf32>
    %155 = vector.extract_strided_slice %152 {offsets = [0, 32], sizes = [8, 16], strides = [1, 1]} : vector<8x64xf32> to vector<8x16xf32>
    %156 = vector.extract_strided_slice %152 {offsets = [0, 48], sizes = [8, 16], strides = [1, 1]} : vector<8x64xf32> to vector<8x16xf32>
    %157 = tpu.concatenate %153, %154, %155, %156 in 0 : vector<8x16xf32>, vector<8x16xf32>, vector<8x16xf32>, vector<8x16xf32> -> vector<32x16xf32>
    %158 = arith.truncf %157 : vector<32x16xf32> to vector<32x16xbf16>
    %c0_65 = arith.constant 0 : index
    %c0_66 = arith.constant 0 : index
    %159 = vector.load %arg20[%c0_65, %c0_66] : memref<2x32xbf16, #tpu.memory_space<vmem>>, vector<2x32xbf16>
    %cst_67 = arith.constant dense<0.000000e+00> : vector<2x16xf32>
    %160 = tpu.matmul %159, %158, %cst_67 {dimension_numbers = #tpu.dot_dimension_numbers<[1], [0], [0], [1], [0, 0, 1, 1], [], []>} : vector<2x32xbf16>, vector<32x16xbf16>, vector<2x16xf32> -> vector<2x16xf32>
    %c0_68 = arith.constant 0 : index
    %c0_69 = arith.constant 0 : index
    %161 = vector.load %arg21[%c0_68, %c0_69] : memref<1x16xf32, #tpu.memory_space<vmem>>, vector<1x16xf32>
    %162 = vector.broadcast %161 : vector<1x16xf32> to vector<2x16xf32>
    %163 = arith.addf %160, %162 : vector<2x16xf32>
    %c0_70 = arith.constant 0 : index
    %c0_71 = arith.constant 0 : index
    %164 = vector.load %arg22[%c0_70, %c0_71] : memref<2x16xf32, #tpu.memory_space<vmem>>, vector<2x16xf32>
    tpu.vector_store %arg22[%c0_70, %c0_71], %163 {strides = array<i32>} : memref<2x16xf32, #tpu.memory_space<vmem>>, vector<2x16xf32>,
    return
  }
  func.func @transform_0(%arg0: i32) -> (i32, i32) {
    %c0_i32 = arith.constant 0 : i32
    %c0_i32_0 = arith.constant 0 : i32
    return %arg0, %c0_i32 : i32, i32
  }
  func.func @transform_1(%arg0: i32) -> (i32, i32) {
    %c0_i32 = arith.constant 0 : i32
    %c0_i32_0 = arith.constant 0 : i32
    %c0_i32_1 = arith.constant 0 : i32
    return %c0_i32, %c0_i32_0 : i32, i32
  }
  func.func @transform_2(%arg0: i32) -> (i32, i32) {
    %c0_i32 = arith.constant 0 : i32
    %c0_i32_0 = arith.constant 0 : i32
    %c0_i32_1 = arith.constant 0 : i32
    return %c0_i32, %c0_i32_0 : i32, i32
  }
  func.func @transform_3(%arg0: i32) -> (i32, i32) {
    %c0_i32 = arith.constant 0 : i32
    %c0_i32_0 = arith.constant 0 : i32
    %c0_i32_1 = arith.constant 0 : i32
    return %c0_i32, %c0_i32_0 : i32, i32
  }
  func.func @transform_4(%arg0: i32) -> (i32, i32) {
    %c0_i32 = arith.constant 0 : i32
    %c0_i32_0 = arith.constant 0 : i32
    %c0_i32_1 = arith.constant 0 : i32
    return %c0_i32, %c0_i32_0 : i32, i32
  }
  func.func @transform_5(%arg0: i32) -> (i32, i32) {
    %c0_i32 = arith.constant 0 : i32
    %c0_i32_0 = arith.constant 0 : i32
    %c0_i32_1 = arith.constant 0 : i32
    return %c0_i32, %c0_i32_0 : i32, i32
  }
  func.func @transform_6(%arg0: i32) -> (i32, i32) {
    %c0_i32 = arith.constant 0 : i32
    %c0_i32_0 = arith.constant 0 : i32
    %c0_i32_1 = arith.constant 0 : i32
    return %c0_i32, %c0_i32_0 : i32, i32
  }
  func.func @transform_7(%arg0: i32) -> (i32, i32) {
    %c0_i32 = arith.constant 0 : i32
    %c0_i32_0 = arith.constant 0 : i32
    %c0_i32_1 = arith.constant 0 : i32
    return %c0_i32, %c0_i32_0 : i32, i32
  }
  func.func @transform_8(%arg0: i32) -> (i32, i32) {
    %c0_i32 = arith.constant 0 : i32
    %c0_i32_0 = arith.constant 0 : i32
    %c0_i32_1 = arith.constant 0 : i32
    return %c0_i32, %c0_i32_0 : i32, i32
  }
  func.func @transform_9(%arg0: i32) -> (i32, i32) {
    %c0_i32 = arith.constant 0 : i32
    %c0_i32_0 = arith.constant 0 : i32
    %c0_i32_1 = arith.constant 0 : i32
    return %c0_i32, %c0_i32_0 : i32, i32
  }
  func.func @transform_10(%arg0: i32) -> (i32, i32) {
    %c0_i32 = arith.constant 0 : i32
    %c0_i32_0 = arith.constant 0 : i32
    %c0_i32_1 = arith.constant 0 : i32
    return %c0_i32, %c0_i32_0 : i32, i32
  }
  func.func @transform_11(%arg0: i32) -> (i32, i32) {
    %c0_i32 = arith.constant 0 : i32
    %c0_i32_0 = arith.constant 0 : i32
    %c0_i32_1 = arith.constant 0 : i32
    return %c0_i32, %c0_i32_0 : i32, i32
  }
  func.func @transform_12(%arg0: i32) -> (i32, i32) {
    %c0_i32 = arith.constant 0 : i32
    %c0_i32_0 = arith.constant 0 : i32
    %c0_i32_1 = arith.constant 0 : i32
    return %c0_i32, %c0_i32_0 : i32, i32
  }
  func.func @transform_13(%arg0: i32) -> (i32, i32) {
    %c0_i32 = arith.constant 0 : i32
    %c0_i32_0 = arith.constant 0 : i32
    %c0_i32_1 = arith.constant 0 : i32
    return %c0_i32, %c0_i32_0 : i32, i32
  }
  func.func @transform_14(%arg0: i32) -> (i32, i32) {
    %c0_i32 = arith.constant 0 : i32
    %c0_i32_0 = arith.constant 0 : i32
    %c0_i32_1 = arith.constant 0 : i32
    return %c0_i32, %c0_i32_0 : i32, i32
  }
  func.func @transform_15(%arg0: i32) -> (i32, i32) {
    %c0_i32 = arith.constant 0 : i32
    %c0_i32_0 = arith.constant 0 : i32
    %c0_i32_1 = arith.constant 0 : i32
    return %c0_i32, %c0_i32_0 : i32, i32
  }
  func.func @transform_16(%arg0: i32) -> (i32, i32) {
    %c0_i32 = arith.constant 0 : i32
    %c0_i32_0 = arith.constant 0 : i32
    %c0_i32_1 = arith.constant 0 : i32
    return %c0_i32, %c0_i32_0 : i32, i32
  }
  func.func @transform_17(%arg0: i32) -> (i32, i32) {
    %c0_i32 = arith.constant 0 : i32
    %c0_i32_0 = arith.constant 0 : i32
    %c0_i32_1 = arith.constant 0 : i32
    return %c0_i32, %c0_i32_0 : i32, i32
  }
  func.func @transform_18(%arg0: i32) -> (i32, i32) {
    %c0_i32 = arith.constant 0 : i32
    %c0_i32_0 = arith.constant 0 : i32
    %c0_i32_1 = arith.constant 0 : i32
    return %c0_i32, %c0_i32_0 : i32, i32
  }
  func.func @transform_19(%arg0: i32) -> (i32, i32) {
    %c0_i32 = arith.constant 0 : i32
    %c0_i32_0 = arith.constant 0 : i32
    %c0_i32_1 = arith.constant 0 : i32
    return %c0_i32, %c0_i32_0 : i32, i32
  }
  func.func @transform_20(%arg0: i32) -> (i32, i32) {
    %c0_i32 = arith.constant 0 : i32
    %c0_i32_0 = arith.constant 0 : i32
    %c0_i32_1 = arith.constant 0 : i32
    return %c0_i32, %c0_i32_0 : i32, i32
  }
  func.func @transform_21(%arg0: i32) -> (i32, i32) {
    %c0_i32 = arith.constant 0 : i32
    %c0_i32_0 = arith.constant 0 : i32
    return %arg0, %c0_i32 : i32, i32
  }
}

</mosaic_0001>

<llo_original>
// kernel: encoder_forward.1
$region0: #{encoder_forward.1}
  #allocation0 [shape = 'u32[]', space=smem, size = 0x4, offset = 0x4, fixed_abs, tag = 'smem constant byte address 0x4 - core index']
  #allocation1 [shape = 'u32[144,128]{1,0:T(1,128)}', space=vmem, size = 0x12000, scoped, tag = 'internal scratch']
  %s0 = inlined_call_operand.vmem [shape: bf16[64,128], index: 0, kind: input, shape index: {}]
  %s1 = inlined_call_operand.vmem [shape: bf16[128,384], index: 1, kind: input, shape index: {}]
  %s2 = inlined_call_operand.vmem [shape: bf16[32,192], index: 2, kind: input, shape index: {}]
  %s3 = inlined_call_operand.vmem [shape: f32[1,128], index: 3, kind: input, shape index: {}]
  %s4 = inlined_call_operand.vmem [shape: bf16[128,384], index: 4, kind: input, shape index: {}]
  %s5 = inlined_call_operand.vmem [shape: f32[32,1], index: 5, kind: input, shape index: {}]
  %s6 = inlined_call_operand.vmem [shape: f32[32,1], index: 6, kind: input, shape index: {}]
  %s7 = inlined_call_operand.vmem [shape: f32[1,128], index: 7, kind: input, shape index: {}]
  %s8 = inlined_call_operand.vmem [shape: bf16[128,384], index: 8, kind: input, shape index: {}]
  %s9 = inlined_call_operand.vmem [shape: bf16[16,96], index: 9, kind: input, shape index: {}]
  %s10 = inlined_call_operand.vmem [shape: f32[1,128], index: 10, kind: input, shape index: {}]
  %s11 = inlined_call_operand.vmem [shape: bf16[128,384], index: 11, kind: input, shape index: {}]
  %s12 = inlined_call_operand.vmem [shape: f32[16,1], index: 12, kind: input, shape index: {}]
  %s13 = inlined_call_operand.vmem [shape: f32[16,1], index: 13, kind: input, shape index: {}]
  %s14 = inlined_call_operand.vmem [shape: f32[1,128], index: 14, kind: input, shape index: {}]
  %s15 = inlined_call_operand.vmem [shape: bf16[128,192], index: 15, kind: input, shape index: {}]
  %s16 = inlined_call_operand.vmem [shape: bf16[8,48], index: 16, kind: input, shape index: {}]
  %s17 = inlined_call_operand.vmem [shape: f32[1,64], index: 17, kind: input, shape index: {}]
  %s18 = inlined_call_operand.vmem [shape: bf16[64,64], index: 18, kind: input, shape index: {}]
  %s19 = inlined_call_operand.vmem [shape: bf16[2,32], index: 19, kind: input, shape index: {}]
  %s20 = inlined_call_operand.vmem [shape: f32[1,16], index: 20, kind: input, shape index: {}]
  %s21 = inlined_call_operand.hbm [shape: f32[2,16], index: 21, kind: output, shape index: {}]
  %s22 = sld [smem:[#allocation0]]
  $region94: #{encoder_forward.1} parent=0
    _
  %s24 = ssub.s32 1, %s22
  %s25 = scalar_select 0, %s24, %s22
  $region1: #{encoder_forward.1} parent=0
    #allocation2 [shape = 'u8[1024]{0}', space=vmem, size = 0x400, scoped, tag = 'output window, operand 0, single buffered']
    #allocation3 [shape = 's32[1]{0}', space=sflag, size = 0x4, scoped, tag = 'scoped memory for encoder_forward.1']
    %26 = vsyncpa [#allocation3], 0
    // Predicated region
    $region2: #{encoder_forward.1} parent=1 // pred_check
      _
    $region3: #{encoder_forward.1} parent=1 // pred_check_branch
      %28 = sbr.rel (0) target = $region5
    $region4: #{encoder_forward.1} parent=1 // pred_region
      _
    $region5: #{encoder_forward.1} parent=1 // pred_fallthru
      _
    // Predicated region
    $region6: #{encoder_forward.1} parent=1 // pred_check
      _
    $region7: #{encoder_forward.1} parent=1 // pred_check_branch
      %30 = sbr.rel (0) target = $region9
    $region8: #{encoder_forward.1} parent=1 // pred_region
      _
    $region9: #{encoder_forward.1} parent=1 // pred_fallthru
      _
    // Predicated region
    $region10: #{encoder_forward.1} parent=1 // pred_check
      _
    $region11: #{encoder_forward.1} parent=1 // pred_check_branch
      %32 = sbr.rel (0) target = $region13
    $region12: #{encoder_forward.1} parent=1 // pred_region
      _
    $region13: #{encoder_forward.1} parent=1 // pred_fallthru
      _
    // Predicated region
    $region14: #{encoder_forward.1} parent=1 // pred_check
      _
    $region15: #{encoder_forward.1} parent=1 // pred_check_branch
      %34 = sbr.rel (0) target = $region17
    $region16: #{encoder_forward.1} parent=1 // pred_region
      _
    $region17: #{encoder_forward.1} parent=1 // pred_fallthru
      _
    // Predicated region
    $region18: #{encoder_forward.1} parent=1 // pred_check
      _
    $region19: #{encoder_forward.1} parent=1 // pred_check_branch
      %36 = sbr.rel (0) target = $region21
    $region20: #{encoder_forward.1} parent=1 // pred_region
      _
    $region21: #{encoder_forward.1} parent=1 // pred_fallthru
      _
    // Predicated region
    $region22: #{encoder_forward.1} parent=1 // pred_check
      _
    $region23: #{encoder_forward.1} parent=1 // pred_check_branch
      %38 = sbr.rel (0) target = $region25
    $region24: #{encoder_forward.1} parent=1 // pred_region
      _
    $region25: #{encoder_forward.1} parent=1 // pred_fallthru
      _
    // Predicated region
    $region26: #{encoder_forward.1} parent=1 // pred_check
      _
    $region27: #{encoder_forward.1} parent=1 // pred_check_branch
      %40 = sbr.rel (0) target = $region29
    $region28: #{encoder_forward.1} parent=1 // pred_region
      _
    $region29: #{encoder_forward.1} parent=1 // pred_fallthru
      _
    // Predicated region
    $region30: #{encoder_forward.1} parent=1 // pred_check
      _
    $region31: #{encoder_forward.1} parent=1 // pred_check_branch
      %42 = sbr.rel (0) target = $region33
    $region32: #{encoder_forward.1} parent=1 // pred_region
      _
    $region33: #{encoder_forward.1} parent=1 // pred_fallthru
      _
    // Predicated region
    $region34: #{encoder_forward.1} parent=1 // pred_check
      _
    $region35: #{encoder_forward.1} parent=1 // pred_check_branch
      %44 = sbr.rel (0) target = $region37
    $region36: #{encoder_forward.1} parent=1 // pred_region
      _
    $region37: #{encoder_forward.1} parent=1 // pred_fallthru
      _
    // Predicated region
    $region38: #{encoder_forward.1} parent=1 // pred_check
      _
    $region39: #{encoder_forward.1} parent=1 // pred_check_branch
      %46 = sbr.rel (0) target = $region41
    $region40: #{encoder_forward.1} parent=1 // pred_region
      _
    $region41: #{encoder_forward.1} parent=1 // pred_fallthru
      _
    // Predicated region
    $region42: #{encoder_forward.1} parent=1 // pred_check
      _
    $region43: #{encoder_forward.1} parent=1 // pred_check_branch
      %48 = sbr.rel (0) target = $region45
    $region44: #{encoder_forward.1} parent=1 // pred_region
      _
    $region45: #{encoder_forward.1} parent=1 // pred_fallthru
      _
    // Predicated region
    $region46: #{encoder_forward.1} parent=1 // pred_check
      _
    $region47: #{encoder_forward.1} parent=1 // pred_check_branch
      %50 = sbr.rel (0) target = $region49
    $region48: #{encoder_forward.1} parent=1 // pred_region
      _
    $region49: #{encoder_forward.1} parent=1 // pred_fallthru
      _
    // Predicated region
    $region50: #{encoder_forward.1} parent=1 // pred_check
      _
    $region51: #{encoder_forward.1} parent=1 // pred_check_branch
      %52 = sbr.rel (0) target = $region53
    $region52: #{encoder_forward.1} parent=1 // pred_region
      _
    $region53: #{encoder_forward.1} parent=1 // pred_fallthru
      _
    // Predicated region
    $region54: #{encoder_forward.1} parent=1 // pred_check
      _
    $region55: #{encoder_forward.1} parent=1 // pred_check_branch
      %54 = sbr.rel (0) target = $region57
    $region56: #{encoder_forward.1} parent=1 // pred_region
      _
    $region57: #{encoder_forward.1} parent=1 // pred_fallthru
      _
    // Predicated region
    $region58: #{encoder_forward.1} parent=1 // pred_check
      _
    $region59: #{encoder_forward.1} parent=1 // pred_check_branch
      %56 = sbr.rel (0) target = $region61
    $region60: #{encoder_forward.1} parent=1 // pred_region
      _
    $region61: #{encoder_forward.1} parent=1 // pred_fallthru
      _
    // Predicated region
    $region62: #{encoder_forward.1} parent=1 // pred_check
      _
    $region63: #{encoder_forward.1} parent=1 // pred_check_branch
      %58 = sbr.rel (0) target = $region65
    $region64: #{encoder_forward.1} parent=1 // pred_region
      _
    $region65: #{encoder_forward.1} parent=1 // pred_fallthru
      _
    // Predicated region
    $region66: #{encoder_forward.1} parent=1 // pred_check
      _
    $region67: #{encoder_forward.1} parent=1 // pred_check_branch
      %60 = sbr.rel (0) target = $region69
    $region68: #{encoder_forward.1} parent=1 // pred_region
      _
    $region69: #{encoder_forward.1} parent=1 // pred_fallthru
      _
    // Predicated region
    $region70: #{encoder_forward.1} parent=1 // pred_check
      _
    $region71: #{encoder_forward.1} parent=1 // pred_check_branch
      %62 = sbr.rel (0) target = $region73
    $region72: #{encoder_forward.1} parent=1 // pred_region
      _
    $region73: #{encoder_forward.1} parent=1 // pred_fallthru
      _
    // Predicated region
    $region74: #{encoder_forward.1} parent=1 // pred_check
      _
    $region75: #{encoder_forward.1} parent=1 // pred_check_branch
      %64 = sbr.rel (0) target = $region77
    $region76: #{encoder_forward.1} parent=1 // pred_region
      _
    $region77: #{encoder_forward.1} parent=1 // pred_fallthru
      _
    // Predicated region
    $region78: #{encoder_forward.1} parent=1 // pred_check
      _
    $region79: #{encoder_forward.1} parent=1 // pred_check_branch
      %66 = sbr.rel (0) target = $region81
    $region80: #{encoder_forward.1} parent=1 // pred_region
      _
    $region81: #{encoder_forward.1} parent=1 // pred_fallthru
      _
    // Predicated region
    $region82: #{encoder_forward.1} parent=1 // pred_check
      _
    $region83: #{encoder_forward.1} parent=1 // pred_check_branch
      %68 = sbr.rel (0) target = $region85
    $region84: #{encoder_forward.1} parent=1 // pred_region
      _
    $region85: #{encoder_forward.1} parent=1 // pred_fallthru
      _
    %v70 = vld [vmem:[%s0] sm:$0xf]
    %v71 = vld [vmem:[%s0 + $0x4] sm:$0xf]
    %v72 = vld [vmem:[%s0 + $0x8] sm:$0xf]
    %v73 = vld [vmem:[%s0 + $0xc] sm:$0xf]
    %v74 = vld [vmem:[%s0 + $0x10] sm:$0xf]
    %v75 = vld [vmem:[%s0 + $0x14] sm:$0xf]
    %v76 = vld [vmem:[%s0 + $0x18] sm:$0xf]
    %v77 = vld [vmem:[%s0 + $0x1c] sm:$0xf]
    %v78 = vld [vmem:[%s1] sm:$0xff]
    %v79 = vld [vmem:[%s1 + $0x8] sm:$0xf]
    %v80 = vld [vmem:[%s1 + $0xc] sm:$0xff]
    %v81 = vld [vmem:[%s1 + $0x14] sm:$0xf]
    %v82 = vld [vmem:[%s1 + $0x18] sm:$0xff]
    %v83 = vld [vmem:[%s1 + $0x20] sm:$0xf]
    %v84 = vld [vmem:[%s1 + $0x24] sm:$0xff]
    %v85 = vld [vmem:[%s1 + $0x2c] sm:$0xf]
    %v86 = vld [vmem:[%s1 + $0x30] sm:$0xff]
    %v87 = vld [vmem:[%s1 + $0x38] sm:$0xf]
    %v88 = vld [vmem:[%s1 + $0x3c] sm:$0xff]
    %v89 = vld [vmem:[%s1 + $0x44] sm:$0xf]
    %v90 = vld [vmem:[%s1 + $0x48] sm:$0xff]
    %v91 = vld [vmem:[%s1 + $0x50] sm:$0xf]
    %v92 = vld [vmem:[%s1 + $0x54] sm:$0xff]
    %v93 = vld [vmem:[%s1 + $0x5c] sm:$0xf]
    %v94 = vld [vmem:[%s1 + $0x60] sm:$0xff]
    %v95 = vld [vmem:[%s1 + $0x68] sm:$0xf]
    %v96 = vld [vmem:[%s1 + $0x6c] sm:$0xff]
    %v97 = vld [vmem:[%s1 + $0x74] sm:$0xf]
    %v98 = vld [vmem:[%s1 + $0x78] sm:$0xff]
    %v99 = vld [vmem:[%s1 + $0x80] sm:$0xf]
    %v100 = vld [vmem:[%s1 + $0x84] sm:$0xff]
    %v101 = vld [vmem:[%s1 + $0x8c] sm:$0xf]
    %v102 = vld [vmem:[%s1 + $0x90] sm:$0xff]
    %v103 = vld [vmem:[%s1 + $0x98] sm:$0xf]
    %v104 = vld [vmem:[%s1 + $0x9c] sm:$0xff]
    %v105 = vld [vmem:[%s1 + $0xa4] sm:$0xf]
    %v106 = vld [vmem:[%s1 + $0xa8] sm:$0xff]
    %v107 = vld [vmem:[%s1 + $0xb0] sm:$0xf]
    %v108 = vld [vmem:[%s1 + $0xb4] sm:$0xff]
    %v109 = vld [vmem:[%s1 + $0xbc] sm:$0xf]
    %v118 = vunpack.c.l.b16 %v70
    %v119 = vunpack.c.l.b16 %v71
    %v120 = vunpack.c.l.b16 %v72
    %v121 = vunpack.c.l.b16 %v73
    %v122 = vunpack.c.l.b16 %v74
    %v123 = vunpack.c.l.b16 %v75
    %v124 = vunpack.c.l.b16 %v76
    %v125 = vunpack.c.l.b16 %v77
    %v126 = vpack.c.b16 %v119, %v118
    %v127 = vpack.c.b16 %v121, %v120
    %v128 = vpack.c.b16 %v123, %v122
    %v129 = vpack.c.b16 %v125, %v124
    %v166 = vunpack.c.l.b16 %v78
    %v167 = vunpack.c.h.b16 %v78
    %v168 = vunpack.c.l.b16 %v79
    %v169 = vunpack.c.l.b16 %v80
    %v170 = vunpack.c.h.b16 %v80
    %v171 = vunpack.c.l.b16 %v81
    %v172 = vunpack.c.l.b16 %v82
    %v173 = vunpack.c.h.b16 %v82
    %v174 = vunpack.c.l.b16 %v83
    %v175 = vunpack.c.l.b16 %v84
    %v176 = vunpack.c.h.b16 %v84
    %v177 = vunpack.c.l.b16 %v85
    %v178 = vunpack.c.l.b16 %v86
    %v179 = vunpack.c.h.b16 %v86
    %v180 = vunpack.c.l.b16 %v87
    %v181 = vunpack.c.l.b16 %v88
    %v182 = vunpack.c.h.b16 %v88
    %v183 = vunpack.c.l.b16 %v89
    %v184 = vunpack.c.l.b16 %v90
    %v185 = vunpack.c.h.b16 %v90
    %v186 = vunpack.c.l.b16 %v91
    %v187 = vunpack.c.l.b16 %v92
    %v188 = vunpack.c.h.b16 %v92
    %v189 = vunpack.c.l.b16 %v93
    %v190 = vunpack.c.l.b16 %v94
    %v191 = vunpack.c.h.b16 %v94
    %v192 = vunpack.c.l.b16 %v95
    %v193 = vunpack.c.l.b16 %v96
    %v194 = vunpack.c.h.b16 %v96
    %v195 = vunpack.c.l.b16 %v97
    %v196 = vunpack.c.l.b16 %v98
    %v197 = vunpack.c.h.b16 %v98
    %v198 = vunpack.c.l.b16 %v99
    %v199 = vunpack.c.l.b16 %v100
    %v200 = vunpack.c.h.b16 %v100
    %v201 = vunpack.c.l.b16 %v101
    %v202 = vunpack.c.l.b16 %v102
    %v203 = vunpack.c.h.b16 %v102
    %v204 = vunpack.c.l.b16 %v103
    %v205 = vunpack.c.l.b16 %v104
    %v206 = vunpack.c.h.b16 %v104
    %v207 = vunpack.c.l.b16 %v105
    %v208 = vunpack.c.l.b16 %v106
    %v209 = vunpack.c.h.b16 %v106
    %v210 = vunpack.c.l.b16 %v107
    %v211 = vunpack.c.l.b16 %v108
    %v212 = vunpack.c.h.b16 %v108
    %v213 = vunpack.c.l.b16 %v109
    %v214 = vpack.c.b16 %v169, %v166
    %v215 = vpack.c.b16 %v170, %v167
    %v216 = vpack.c.b16 %v171, %v168
    %v217 = vpack.c.b16 %v175, %v172
    %v218 = vpack.c.b16 %v176, %v173
    %v219 = vpack.c.b16 %v177, %v174
    %v220 = vpack.c.b16 %v181, %v178
    %v221 = vpack.c.b16 %v182, %v179
    %v222 = vpack.c.b16 %v183, %v180
    %v223 = vpack.c.b16 %v187, %v184
    %v224 = vpack.c.b16 %v188, %v185
    %v225 = vpack.c.b16 %v189, %v186
    %v226 = vpack.c.b16 %v193, %v190
    %v227 = vpack.c.b16 %v194, %v191
    %v228 = vpack.c.b16 %v195, %v192
    %v229 = vpack.c.b16 %v199, %v196
    %v230 = vpack.c.b16 %v200, %v197
    %v231 = vpack.c.b16 %v201, %v198
    %v232 = vpack.c.b16 %v205, %v202
    %v233 = vpack.c.b16 %v206, %v203
    %v234 = vpack.c.b16 %v207, %v204
    %v235 = vpack.c.b16 %v211, %v208
    %v236 = vpack.c.b16 %v212, %v209
    %v237 = vpack.c.b16 %v213, %v210
    %262 = vmatprep.subr.bf16.mxu0 %v236
    %263 = vmatpush1.bf16.msra.mxu0 %v235
    %264 = vmatprep.subr.bf16.mxu0 %v233
    %265 = vmatpush1.bf16.msra.mxu0 %v232
    %266 = vmatprep.subr.bf16.mxu0 %v230
    %267 = vmatpush1.bf16.msra.mxu0 %v229
    %268 = vmatprep.subr.bf16.mxu0 %v227
    %269 = vmatpush1.bf16.msra.mxu0 %v226
    %270 = vmatprep.subr.bf16.mxu0 %v224
    %271 = vmatpush1.bf16.msra.mxu0 %v223
    %272 = vmatprep.subr.bf16.mxu0 %v221
    %273 = vmatpush1.bf16.msra.mxu0 %v220
    %274 = vmatprep.subr.bf16.mxu0 %v218
    %275 = vmatpush1.bf16.msra.mxu0 %v217
    %276 = vmatprep.subr.bf16.mxu0 %v215
    %277 = vmatpush1.bf16.msra.mxu0 %v214
    %278 = vmatprep.subr.bf16.mxu0 0
    %279 = vmatpush2.bf16.msra.mxu0 0
    %280 = vmatprep.subr.bf16.mxu0 0
    %281 = vmatpush2.bf16.msra.mxu0 0
    %282 = vmatprep.subr.bf16.mxu0 0
    %283 = vmatpush2.bf16.msra.mxu0 0
    %284 = vmatprep.subr.bf16.mxu0 0
    %285 = vmatpush2.bf16.msra.mxu0 0
    %286 = vmatprep.subr.bf16.mxu0 0
    %287 = vmatpush2.bf16.msra.mxu0 0
    %288 = vmatprep.subr.bf16.mxu0 0
    %289 = vmatpush2.bf16.msra.mxu0 0
    %290 = vmatprep.subr.bf16.mxu0 0
    %291 = vmatpush2.bf16.msra.mxu0 0
    %292 = vmatprep.subr.bf16.mxu0 0
    %293 = vmatpush2.bf16.msra.mxu0 0
    %294 = vmatprep.mubr.bf16.mxu0 0
    %295 = vmatmul.mubr.bf16.gmra.mxu0 %v126
    %v296 = vpop.f32.mrf.mxu0
    %v297 = vadd.f32 0.0, %v296
    %v298 = vpop.f32.mrf.mxu0
    %v299 = vadd.f32 0.0, %v298
    %v300 = vpop.f32.mrf.mxu0
    %v301 = vadd.f32 0.0, %v300
    %v302 = vpop.f32.mrf.mxu0
    %v303 = vadd.f32 0.0, %v302
    %304 = vmatprep.mubr.bf16.mxu0 0
    %305 = vmatmul.mubr.bf16.gmra.mxu0 %v127
    %v306 = vpop.f32.mrf.mxu0
    %v307 = vadd.f32 0.0, %v306
    %v308 = vpop.f32.mrf.mxu0
    %v309 = vadd.f32 0.0, %v308
    %v310 = vpop.f32.mrf.mxu0
    %v311 = vadd.f32 0.0, %v310
    %v312 = vpop.f32.mrf.mxu0
    %v313 = vadd.f32 0.0, %v312
    %314 = vmatprep.mubr.bf16.mxu0 0
    %315 = vmatmul.mubr.bf16.gmra.mxu0 %v128
    %v316 = vpop.f32.mrf.mxu0
    %v317 = vadd.f32 0.0, %v316
    %v318 = vpop.f32.mrf.mxu0
    %v319 = vadd.f32 0.0, %v318
    %v320 = vpop.f32.mrf.mxu0
    %v321 = vadd.f32 0.0, %v320
    %v322 = vpop.f32.mrf.mxu0
    %v323 = vadd.f32 0.0, %v322
    %324 = vmatprep.mubr.bf16.mxu0 0
    %325 = vmatmul.mubr.bf16.gmra.mxu0 %v129
    %v326 = vpop.f32.mrf.mxu0
    %v327 = vadd.f32 0.0, %v326
    %v328 = vpop.f32.mrf.mxu0
    %v329 = vadd.f32 0.0, %v328
    %v330 = vpop.f32.mrf.mxu0
    %v331 = vadd.f32 0.0, %v330
    %v332 = vpop.f32.mrf.mxu0
    %v333 = vadd.f32 0.0, %v332
    %334 = vdwg.mxu0
    %335 = vmatprep.subr.bf16.mxu0 0
    %336 = vmatpush1.bf16.msra.mxu0 %v237
    %337 = vmatprep.subr.bf16.mxu0 0
    %338 = vmatpush1.bf16.msra.mxu0 %v234
    %339 = vmatprep.subr.bf16.mxu0 0
    %340 = vmatpush1.bf16.msra.mxu0 %v231
    %341 = vmatprep.subr.bf16.mxu0 0
    %342 = vmatpush1.bf16.msra.mxu0 %v228
    %343 = vmatprep.subr.bf16.mxu0 0
    %344 = vmatpush1.bf16.msra.mxu0 %v225
    %345 = vmatprep.subr.bf16.mxu0 0
    %346 = vmatpush1.bf16.msra.mxu0 %v222
    %347 = vmatprep.subr.bf16.mxu0 0
    %348 = vmatpush1.bf16.msra.mxu0 %v219
    %349 = vmatprep.subr.bf16.mxu0 0
    %350 = vmatpush1.bf16.msra.mxu0 %v216
    %351 = vmatprep.subr.bf16.mxu0 0
    %352 = vmatpush2.bf16.msra.mxu0 0
    %353 = vmatprep.subr.bf16.mxu0 0
    %354 = vmatpush2.bf16.msra.mxu0 0
    %355 = vmatprep.subr.bf16.mxu0 0
    %356 = vmatpush2.bf16.msra.mxu0 0
    %357 = vmatprep.subr.bf16.mxu0 0
    %358 = vmatpush2.bf16.msra.mxu0 0
    %359 = vmatprep.subr.bf16.mxu0 0
    %360 = vmatpush2.bf16.msra.mxu0 0
    %361 = vmatprep.subr.bf16.mxu0 0
    %362 = vmatpush2.bf16.msra.mxu0 0
    %363 = vmatprep.subr.bf16.mxu0 0
    %364 = vmatpush2.bf16.msra.mxu0 0
    %365 = vmatprep.subr.bf16.mxu0 0
    %366 = vmatpush2.bf16.msra.mxu0 0
    %367 = vmatprep.mubr.bf16.mxu0 0
    %368 = vmatmul.mubr.bf16.gmra.mxu0 %v126
    %v369 = vpop.f32.mrf.mxu0
    %v370 = vadd.f32 0.0, %v369
    %v371 = vpop.f32.mrf.mxu0
    %v372 = vpop.f32.mrf.mxu0
    %v373 = vadd.f32 0.0, %v372
    %v374 = vpop.f32.mrf.mxu0
    %375 = vmatprep.mubr.bf16.mxu0 0
    %376 = vmatmul.mubr.bf16.gmra.mxu0 %v127
    %v377 = vpop.f32.mrf.mxu0
    %v378 = vadd.f32 0.0, %v377
    %v379 = vpop.f32.mrf.mxu0
    %v380 = vpop.f32.mrf.mxu0
    %v381 = vadd.f32 0.0, %v380
    %v382 = vpop.f32.mrf.mxu0
    %383 = vmatprep.mubr.bf16.mxu0 0
    %384 = vmatmul.mubr.bf16.gmra.mxu0 %v128
    %v385 = vpop.f32.mrf.mxu0
    %v386 = vadd.f32 0.0, %v385
    %v387 = vpop.f32.mrf.mxu0
    %v388 = vpop.f32.mrf.mxu0
    %v389 = vadd.f32 0.0, %v388
    %v390 = vpop.f32.mrf.mxu0
    %391 = vmatprep.mubr.bf16.mxu0 0
    %392 = vmatmul.mubr.bf16.gmra.mxu0 %v129
    %v393 = vpop.f32.mrf.mxu0
    %v394 = vadd.f32 0.0, %v393
    %v395 = vpop.f32.mrf.mxu0
    %v396 = vpop.f32.mrf.mxu0
    %v397 = vadd.f32 0.0, %v396
    %v398 = vpop.f32.mrf.mxu0
    %399 = vdwg.mxu0
    %v400 = vpack.c.bf16 %v301, %v297
    %v401 = vpack.c.bf16 %v311, %v307
    %v402 = vpack.c.bf16 %v321, %v317
    %v403 = vpack.c.bf16 %v331, %v327
    %v404 = vpack.c.bf16 %v303, %v299
    %v405 = vpack.c.bf16 %v313, %v309
    %v406 = vpack.c.bf16 %v323, %v319
    %v407 = vpack.c.bf16 %v333, %v329
    %v408 = vpack.c.bf16 %v373, %v370
    %v409 = vpack.c.bf16 %v381, %v378
    %v410 = vpack.c.bf16 %v389, %v386
    %v411 = vpack.c.bf16 %v397, %v394
    %v412 = vld [vmem:[%s2] sm:$0xff]
    %v413 = vld [vmem:[%s2 + $0x8] sm:$0xff]
    %v414 = vld [vmem:[%s2 + $0x10] sm:$0xff]
    %v415 = vld [vmem:[%s2 + $0x18] sm:$0xff]
    %v416 = vld [vmem:[%s3] sm:$0x1]
    %v418 = vlaneseq
    %v419 = vshrl.u32 %v418, 7
    %v420 = vsub.s32 0, %v419
    %v421 = vrot.slane %v416, %v420
    %v427 = vunpack.c.l.b16 %v412
    %v428 = vunpack.c.h.b16 %v412
    %v429 = vunpack.c.l.b16 %v413
    %v430 = vunpack.c.h.b16 %v413
    %v431 = vunpack.c.l.b16 %v414
    %v432 = vunpack.c.h.b16 %v414
    %v433 = vunpack.c.l.b16 %v415
    %v434 = vunpack.c.h.b16 %v415
    %v435 = vpack.c.b16 %v429, %v427
    %v436 = vpack.c.b16 %v430, %v428
    %v437 = vpack.c.b16 %v433, %v431
    %v438 = vpack.c.b16 %v434, %v432
    %vm441 = vcmask 523264
    %v443 = vsel %vm441, %v436, 0
    %v446 = vsel %vm441, %v438, 0
    %448 = vmatprep.subr.bf16.mxu0 0
    %449 = vmatpush1.bf16.msra.mxu0 %v407
    %450 = vmatprep.subr.bf16.mxu0 0
    %451 = vmatpush1.bf16.msra.mxu0 %v406
    %452 = vmatprep.subr.bf16.mxu0 0
    %453 = vmatpush1.bf16.msra.mxu0 %v405
    %454 = vmatprep.subr.bf16.mxu0 0
    %455 = vmatpush1.bf16.msra.mxu0 %v404
    %456 = vmatprep.subr.bf16.mxu0 0
    %457 = vmatpush1.bf16.msra.mxu0 %v403
    %458 = vmatprep.subr.bf16.mxu0 0
    %459 = vmatpush1.bf16.msra.mxu0 %v402
    %460 = vmatprep.subr.bf16.mxu0 0
    %461 = vmatpush1.bf16.msra.mxu0 %v401
    %462 = vmatprep.subr.bf16.mxu0 0
    %463 = vmatpush1.bf16.msra.mxu0 %v400
    %464 = vmatprep.subr.bf16.mxu0 0
    %465 = vmatpush2.bf16.msra.mxu0 0
    %466 = vmatprep.subr.bf16.mxu0 0
    %467 = vmatpush2.bf16.msra.mxu0 0
    %468 = vmatprep.subr.bf16.mxu0 0
    %469 = vmatpush2.bf16.msra.mxu0 0
    %470 = vmatprep.subr.bf16.mxu0 0
    %471 = vmatpush2.bf16.msra.mxu0 0
    %472 = vmatprep.subr.bf16.mxu0 0
    %473 = vmatpush2.bf16.msra.mxu0 %v411
    %474 = vmatprep.subr.bf16.mxu0 0
    %475 = vmatpush2.bf16.msra.mxu0 %v410
    %476 = vmatprep.subr.bf16.mxu0 0
    %477 = vmatpush2.bf16.msra.mxu0 %v409
    %478 = vmatprep.subr.bf16.mxu0 0
    %479 = vmatpush2.bf16.msra.mxu0 %v408
    %480 = vmatprep.mubr.bf16.mxu0 %v443
    %481 = vmatmul.mubr.bf16.gmra.mxu0 %v435
    %v482 = vpop.f32.mrf.mxu0
    %v483 = vadd.f32 %v421, %v482
    %v484 = vpop.f32.mrf.mxu0
    %v485 = vpop.f32.mrf.mxu0
    %v486 = vadd.f32 %v421, %v485
    %v487 = vpop.f32.mrf.mxu0
    %488 = vmatprep.mubr.bf16.mxu0 %v446
    %489 = vmatmul.mubr.bf16.gmra.mxu0 %v437
    %v490 = vpop.f32.mrf.mxu0
    %v491 = vadd.f32 %v421, %v490
    %v492 = vpop.f32.mrf.mxu0
    %v493 = vpop.f32.mrf.mxu0
    %v494 = vadd.f32 %v421, %v493
    %v495 = vpop.f32.mrf.mxu0
    %496 = vdwg.mxu0
    %v497 = vmul.f32 %v483, %v483
    %v498 = vmul.f32 %v486, %v486
    %v499 = vmul.f32 %v491, %v491
    %v500 = vmul.f32 %v494, %v494
    %v501 = vmul.f32 %v483, %v497
    %v502 = vmul.f32 %v486, %v498
    %v503 = vmul.f32 %v491, %v499
    %v504 = vmul.f32 %v494, %v500
    %v505 = vmul.f32 %v501, 0.044715
    %v506 = vmul.f32 %v502, 0.044715
    %v507 = vmul.f32 %v503, 0.044715
    %v508 = vmul.f32 %v504, 0.044715
    %v509 = vadd.f32 %v483, %v505
    %v510 = vadd.f32 %v486, %v506
    %v511 = vadd.f32 %v491, %v507
    %v512 = vadd.f32 %v494, %v508
    %v513 = vmul.f32 %v509, 0.7978846
    %v514 = vmul.f32 %v510, 0.7978846
    %v515 = vmul.f32 %v511, 0.7978846
    %v516 = vmul.f32 %v512, 0.7978846
    %v517 = vtanh.pop %v513
    %v518 = vtanh.pop %v514
    %v519 = vtanh.pop %v515
    %v520 = vtanh.pop %v516
    %v521 = vadd.f32 %v517, 1.0
    %v522 = vadd.f32 %v518, 1.0
    %v523 = vadd.f32 %v519, 1.0
    %v524 = vadd.f32 %v520, 1.0
    %v525 = vmul.f32 %v521, 0.5
    %v526 = vmul.f32 %v522, 0.5
    %v527 = vmul.f32 %v523, 0.5
    %v528 = vmul.f32 %v524, 0.5
    %v529 = vmul.f32 %v483, %v525
    %v530 = vmul.f32 %v486, %v526
    %v531 = vmul.f32 %v491, %v527
    %v532 = vmul.f32 %v494, %v528
    %v533 = vpack.c.bf16 %v530, %v529
    %v534 = vpack.c.bf16 %v532, %v531
    %v535 = vld [vmem:[%s4] sm:$0xff]
    %v536 = vld [vmem:[%s4 + $0x8] sm:$0xf]
    %v537 = vld [vmem:[%s4 + $0xc] sm:$0xff]
    %v538 = vld [vmem:[%s4 + $0x14] sm:$0xf]
    %v539 = vld [vmem:[%s4 + $0x18] sm:$0xff]
    %v540 = vld [vmem:[%s4 + $0x20] sm:$0xf]
    %v541 = vld [vmem:[%s4 + $0x24] sm:$0xff]
    %v542 = vld [vmem:[%s4 + $0x2c] sm:$0xf]
    %v543 = vld [vmem:[%s4 + $0x30] sm:$0xff]
    %v544 = vld [vmem:[%s4 + $0x38] sm:$0xf]
    %v545 = vld [vmem:[%s4 + $0x3c] sm:$0xff]
    %v546 = vld [vmem:[%s4 + $0x44] sm:$0xf]
    %v547 = vld [vmem:[%s4 + $0x48] sm:$0xff]
    %v548 = vld [vmem:[%s4 + $0x50] sm:$0xf]
    %v549 = vld [vmem:[%s4 + $0x54] sm:$0xff]
    %v550 = vld [vmem:[%s4 + $0x5c] sm:$0xf]
    %v551 = vld [vmem:[%s4 + $0x60] sm:$0xff]
    %v552 = vld [vmem:[%s4 + $0x68] sm:$0xf]
    %v553 = vld [vmem:[%s4 + $0x6c] sm:$0xff]
    %v554 = vld [vmem:[%s4 + $0x74] sm:$0xf]
    %v555 = vld [vmem:[%s4 + $0x78] sm:$0xff]
    %v556 = vld [vmem:[%s4 + $0x80] sm:$0xf]
    %v557 = vld [vmem:[%s4 + $0x84] sm:$0xff]
    %v558 = vld [vmem:[%s4 + $0x8c] sm:$0xf]
    %v559 = vld [vmem:[%s4 + $0x90] sm:$0xff]
    %v560 = vld [vmem:[%s4 + $0x98] sm:$0xf]
    %v561 = vld [vmem:[%s4 + $0x9c] sm:$0xff]
    %v562 = vld [vmem:[%s4 + $0xa4] sm:$0xf]
    %v563 = vld [vmem:[%s4 + $0xa8] sm:$0xff]
    %v564 = vld [vmem:[%s4 + $0xb0] sm:$0xf]
    %v565 = vld [vmem:[%s4 + $0xb4] sm:$0xff]
    %v566 = vld [vmem:[%s4 + $0xbc] sm:$0xf]
    %v599 = vunpack.c.l.b16 %v535
    %v600 = vunpack.c.h.b16 %v535
    %v601 = vunpack.c.l.b16 %v536
    %v602 = vunpack.c.l.b16 %v537
    %v603 = vunpack.c.h.b16 %v537
    %v604 = vunpack.c.l.b16 %v538
    %v605 = vunpack.c.l.b16 %v539
    %v606 = vunpack.c.h.b16 %v539
    %v607 = vunpack.c.l.b16 %v540
    %v608 = vunpack.c.l.b16 %v541
    %v609 = vunpack.c.h.b16 %v541
    %v610 = vunpack.c.l.b16 %v542
    %v611 = vunpack.c.l.b16 %v543
    %v612 = vunpack.c.h.b16 %v543
    %v613 = vunpack.c.l.b16 %v544
    %v614 = vunpack.c.l.b16 %v545
    %v615 = vunpack.c.h.b16 %v545
    %v616 = vunpack.c.l.b16 %v546
    %v617 = vunpack.c.l.b16 %v547
    %v618 = vunpack.c.h.b16 %v547
    %v619 = vunpack.c.l.b16 %v548
    %v620 = vunpack.c.l.b16 %v549
    %v621 = vunpack.c.h.b16 %v549
    %v622 = vunpack.c.l.b16 %v550
    %v623 = vunpack.c.l.b16 %v551
    %v624 = vunpack.c.h.b16 %v551
    %v625 = vunpack.c.l.b16 %v552
    %v626 = vunpack.c.l.b16 %v553
    %v627 = vunpack.c.h.b16 %v553
    %v628 = vunpack.c.l.b16 %v554
    %v629 = vunpack.c.l.b16 %v555
    %v630 = vunpack.c.h.b16 %v555
    %v631 = vunpack.c.l.b16 %v556
    %v632 = vunpack.c.l.b16 %v557
    %v633 = vunpack.c.h.b16 %v557
    %v634 = vunpack.c.l.b16 %v558
    %v635 = vunpack.c.l.b16 %v559
    %v636 = vunpack.c.h.b16 %v559
    %v637 = vunpack.c.l.b16 %v560
    %v638 = vunpack.c.l.b16 %v561
    %v639 = vunpack.c.h.b16 %v561
    %v640 = vunpack.c.l.b16 %v562
    %v641 = vunpack.c.l.b16 %v563
    %v642 = vunpack.c.h.b16 %v563
    %v643 = vunpack.c.l.b16 %v564
    %v644 = vunpack.c.l.b16 %v565
    %v645 = vunpack.c.h.b16 %v565
    %v646 = vunpack.c.l.b16 %v566
    %v647 = vpack.c.b16 %v602, %v599
    %v648 = vpack.c.b16 %v603, %v600
    %v649 = vpack.c.b16 %v604, %v601
    %v650 = vpack.c.b16 %v608, %v605
    %v651 = vpack.c.b16 %v609, %v606
    %v652 = vpack.c.b16 %v610, %v607
    %v653 = vpack.c.b16 %v614, %v611
    %v654 = vpack.c.b16 %v615, %v612
    %v655 = vpack.c.b16 %v616, %v613
    %v656 = vpack.c.b16 %v620, %v617
    %v657 = vpack.c.b16 %v621, %v618
    %v658 = vpack.c.b16 %v622, %v619
    %v659 = vpack.c.b16 %v626, %v623
    %v660 = vpack.c.b16 %v627, %v624
    %v661 = vpack.c.b16 %v628, %v625
    %v662 = vpack.c.b16 %v632, %v629
    %v663 = vpack.c.b16 %v633, %v630
    %v664 = vpack.c.b16 %v634, %v631
    %v665 = vpack.c.b16 %v638, %v635
    %v666 = vpack.c.b16 %v639, %v636
    %v667 = vpack.c.b16 %v640, %v637
    %v668 = vpack.c.b16 %v644, %v641
    %v669 = vpack.c.b16 %v645, %v642
    %v670 = vpack.c.b16 %v646, %v643
    %695 = vmatprep.subr.bf16.mxu0 %v669
    %696 = vmatpush1.bf16.msra.mxu0 %v668
    %697 = vmatprep.subr.bf16.mxu0 %v666
    %698 = vmatpush1.bf16.msra.mxu0 %v665
    %699 = vmatprep.subr.bf16.mxu0 %v663
    %700 = vmatpush1.bf16.msra.mxu0 %v662
    %701 = vmatprep.subr.bf16.mxu0 %v660
    %702 = vmatpush1.bf16.msra.mxu0 %v659
    %703 = vmatprep.subr.bf16.mxu0 %v657
    %704 = vmatpush1.bf16.msra.mxu0 %v656
    %705 = vmatprep.subr.bf16.mxu0 %v654
    %706 = vmatpush1.bf16.msra.mxu0 %v653
    %707 = vmatprep.subr.bf16.mxu0 %v651
    %708 = vmatpush1.bf16.msra.mxu0 %v650
    %709 = vmatprep.subr.bf16.mxu0 %v648
    %710 = vmatpush1.bf16.msra.mxu0 %v647
    %711 = vmatprep.subr.bf16.mxu0 0
    %712 = vmatpush2.bf16.msra.mxu0 0
    %713 = vmatprep.subr.bf16.mxu0 0
    %714 = vmatpush2.bf16.msra.mxu0 0
    %715 = vmatprep.subr.bf16.mxu0 0
    %716 = vmatpush2.bf16.msra.mxu0 0
    %717 = vmatprep.subr.bf16.mxu0 0
    %718 = vmatpush2.bf16.msra.mxu0 0
    %719 = vmatprep.subr.bf16.mxu0 0
    %720 = vmatpush2.bf16.msra.mxu0 0
    %721 = vmatprep.subr.bf16.mxu0 0
    %722 = vmatpush2.bf16.msra.mxu0 0
    %723 = vmatprep.subr.bf16.mxu0 0
    %724 = vmatpush2.bf16.msra.mxu0 0
    %725 = vmatprep.subr.bf16.mxu0 0
    %726 = vmatpush2.bf16.msra.mxu0 0
    %727 = vmatprep.mubr.bf16.mxu0 0
    %728 = vmatmul.mubr.bf16.gmra.mxu0 %v533
    %v729 = vpop.f32.mrf.mxu0
    %v730 = vadd.f32 0.0, %v729
    %v731 = vpop.f32.mrf.mxu0
    %v732 = vadd.f32 0.0, %v731
    %v733 = vpop.f32.mrf.mxu0
    %v734 = vadd.f32 0.0, %v733
    %v735 = vpop.f32.mrf.mxu0
    %v736 = vadd.f32 0.0, %v735
    %737 = vmatprep.mubr.bf16.mxu0 0
    %738 = vmatmul.mubr.bf16.gmra.mxu0 %v534
    %v739 = vpop.f32.mrf.mxu0
    %v740 = vadd.f32 0.0, %v739
    %v741 = vpop.f32.mrf.mxu0
    %v742 = vadd.f32 0.0, %v741
    %v743 = vpop.f32.mrf.mxu0
    %v744 = vadd.f32 0.0, %v743
    %v745 = vpop.f32.mrf.mxu0
    %v746 = vadd.f32 0.0, %v745
    %747 = vdwg.mxu0
    %748 = vmatprep.subr.bf16.mxu0 0
    %749 = vmatpush1.bf16.msra.mxu0 %v670
    %750 = vmatprep.subr.bf16.mxu0 0
    %751 = vmatpush1.bf16.msra.mxu0 %v667
    %752 = vmatprep.subr.bf16.mxu0 0
    %753 = vmatpush1.bf16.msra.mxu0 %v664
    %754 = vmatprep.subr.bf16.mxu0 0
    %755 = vmatpush1.bf16.msra.mxu0 %v661
    %756 = vmatprep.subr.bf16.mxu0 0
    %757 = vmatpush1.bf16.msra.mxu0 %v658
    %758 = vmatprep.subr.bf16.mxu0 0
    %759 = vmatpush1.bf16.msra.mxu0 %v655
    %760 = vmatprep.subr.bf16.mxu0 0
    %761 = vmatpush1.bf16.msra.mxu0 %v652
    %762 = vmatprep.subr.bf16.mxu0 0
    %763 = vmatpush1.bf16.msra.mxu0 %v649
    %764 = vmatprep.subr.bf16.mxu0 0
    %765 = vmatpush2.bf16.msra.mxu0 0
    %766 = vmatprep.subr.bf16.mxu0 0
    %767 = vmatpush2.bf16.msra.mxu0 0
    %768 = vmatprep.subr.bf16.mxu0 0
    %769 = vmatpush2.bf16.msra.mxu0 0
    %770 = vmatprep.subr.bf16.mxu0 0
    %771 = vmatpush2.bf16.msra.mxu0 0
    %772 = vmatprep.subr.bf16.mxu0 0
    %773 = vmatpush2.bf16.msra.mxu0 0
    %774 = vmatprep.subr.bf16.mxu0 0
    %775 = vmatpush2.bf16.msra.mxu0 0
    %776 = vmatprep.subr.bf16.mxu0 0
    %777 = vmatpush2.bf16.msra.mxu0 0
    %778 = vmatprep.subr.bf16.mxu0 0
    %779 = vmatpush2.bf16.msra.mxu0 0
    %780 = vmatprep.mubr.bf16.mxu0 0
    %781 = vmatmul.mubr.bf16.gmra.mxu0 %v533
    %v782 = vpop.f32.mrf.mxu0
    %v783 = vadd.f32 0.0, %v782
    %v784 = vpop.f32.mrf.mxu0
    %v785 = vpop.f32.mrf.mxu0
    %v786 = vadd.f32 0.0, %v785
    %v787 = vpop.f32.mrf.mxu0
    %788 = vmatprep.mubr.bf16.mxu0 0
    %789 = vmatmul.mubr.bf16.gmra.mxu0 %v534
    %v790 = vpop.f32.mrf.mxu0
    %v791 = vadd.f32 0.0, %v790
    %v792 = vpop.f32.mrf.mxu0
    %v793 = vpop.f32.mrf.mxu0
    %v794 = vadd.f32 0.0, %v793
    %v795 = vpop.f32.mrf.mxu0
    %796 = vdwg.mxu0
    %v798 = vrot.slane %v744, 7
    %vm803 = vcmask 1040384
    %v804 = vrot.slane %v730, 7
    %v805 = vrot.slane %v734, 7
    %v806 = vsel %vm803, %v804, %v805
    %v807 = vrot.slane %v740, 7
    %v808 = vsel %vm803, %v805, %v807
    %v809 = vsel %vm803, %v807, %v798
    %v814 = vsel %vm803, %v798, %v804
    %vm819 = vcmask 1046528
    %v820 = vrot.slane %v783, 1
    %v821 = vrot.slane %v786, 1
    %v822 = vsel %vm819, %v820, %v821
    %v823 = vrot.slane %v791, 1
    %v824 = vsel %vm819, %v821, %v823
    %v825 = vrot.slane %v794, 1
    %v826 = vsel %vm819, %v823, %v825
    %v832 = vsel %vm819, %v825, %v820
    %v833 = vld [vmem:[%s5] sm:$0xff]
    %v834 = vld [vmem:[%s5 + $0x8] sm:$0xff]
    %v835 = vld [vmem:[%s5 + $0x10] sm:$0xff]
    %v836 = vld [vmem:[%s5 + $0x18] sm:$0xff]
    %838 = vset.pattern.permute.xlu0 0
    %839 = vperm.xlu0 %838, %v833
    %v840 = vpop.permute.xlu0 %839
    %843 = vset.pattern.permute.xlu0 0
    %844 = vperm.xlu0 %843, %v834
    %v845 = vpop.permute.xlu0 %844
    %848 = vset.pattern.permute.xlu0 0
    %849 = vperm.xlu0 %848, %v835
    %v850 = vpop.permute.xlu0 %849
    %853 = vset.pattern.permute.xlu0 0
    %854 = vperm.xlu0 %853, %v836
    %v855 = vpop.permute.xlu0 %854
    %v857 = vmul.f32 %v814, %v840
    %v858 = vmul.f32 %v806, %v845
    %v859 = vmul.f32 %v808, %v850
    %v860 = vmul.f32 %v809, %v855
    %v861 = vadd.f32 %v857, %v732
    %v862 = vadd.f32 %v858, %v736
    %v863 = vadd.f32 %v859, %v742
    %v864 = vadd.f32 %v860, %v746
    %v865 = vld [vmem:[%s6] sm:$0xff]
    %v866 = vld [vmem:[%s6 + $0x8] sm:$0xff]
    %v867 = vld [vmem:[%s6 + $0x10] sm:$0xff]
    %v868 = vld [vmem:[%s6 + $0x18] sm:$0xff]
    %870 = vset.pattern.permute.xlu0 0
    %871 = vperm.xlu0 %870, %v865
    %v872 = vpop.permute.xlu0 %871
    %875 = vset.pattern.permute.xlu0 0
    %876 = vperm.xlu0 %875, %v866
    %v877 = vpop.permute.xlu0 %876
    %880 = vset.pattern.permute.xlu0 0
    %881 = vperm.xlu0 %880, %v867
    %v882 = vpop.permute.xlu0 %881
    %885 = vset.pattern.permute.xlu0 0
    %886 = vperm.xlu0 %885, %v868
    %v887 = vpop.permute.xlu0 %886
    %v889 = vmul.f32 %v822, %v872
    %v890 = vmul.f32 %v824, %v877
    %v891 = vmul.f32 %v826, %v882
    %v892 = vmul.f32 %v832, %v887
    %v893 = vadd.f32 %v861, %v889
    %v894 = vadd.f32 %v862, %v890
    %v895 = vadd.f32 %v863, %v891
    %v896 = vadd.f32 %v864, %v892
    %v897 = vld [vmem:[%s7] sm:$0x1]
    %v899 = vlaneseq
    %v900 = vshrl.u32 %v899, 7
    %v901 = vsub.s32 0, %v900
    %v902 = vrot.slane %v897, %v901
    %v904 = vadd.f32 %v893, %v902
    %v905 = vadd.f32 %v894, %v902
    %v906 = vadd.f32 %v895, %v902
    %v907 = vadd.f32 %v896, %v902
    %v908 = vmul.f32 %v904, %v904
    %v909 = vmul.f32 %v905, %v905
    %v910 = vmul.f32 %v906, %v906
    %v911 = vmul.f32 %v907, %v907
    %v912 = vmul.f32 %v904, %v908
    %v913 = vmul.f32 %v905, %v909
    %v914 = vmul.f32 %v906, %v910
    %v915 = vmul.f32 %v907, %v911
    %v916 = vmul.f32 %v912, 0.044715
    %v917 = vmul.f32 %v913, 0.044715
    %v918 = vmul.f32 %v914, 0.044715
    %v919 = vmul.f32 %v915, 0.044715
    %v920 = vadd.f32 %v904, %v916
    %v921 = vadd.f32 %v905, %v917
    %v922 = vadd.f32 %v906, %v918
    %v923 = vadd.f32 %v907, %v919
    %v924 = vmul.f32 %v920, 0.7978846
    %v925 = vmul.f32 %v921, 0.7978846
    %v926 = vmul.f32 %v922, 0.7978846
    %v927 = vmul.f32 %v923, 0.7978846
    %v928 = vtanh.pop %v924
    %v929 = vtanh.pop %v925
    %v930 = vtanh.pop %v926
    %v931 = vtanh.pop %v927
    %v932 = vadd.f32 %v928, 1.0
    %v933 = vadd.f32 %v929, 1.0
    %v934 = vadd.f32 %v930, 1.0
    %v935 = vadd.f32 %v931, 1.0
    %v936 = vmul.f32 %v932, 0.5
    %v937 = vmul.f32 %v933, 0.5
    %v938 = vmul.f32 %v934, 0.5
    %v939 = vmul.f32 %v935, 0.5
    %v940 = vmul.f32 %v904, %v936
    %v941 = vmul.f32 %v905, %v937
    %v942 = vmul.f32 %v906, %v938
    %v943 = vmul.f32 %v907, %v939
    %v944 = vpack.c.bf16 %v941, %v940
    %v945 = vpack.c.bf16 %v943, %v942
    %v946 = vld [vmem:[%s8] sm:$0xff]
    %v947 = vld [vmem:[%s8 + $0x8] sm:$0xf]
    %v948 = vld [vmem:[%s8 + $0xc] sm:$0xff]
    %v949 = vld [vmem:[%s8 + $0x14] sm:$0xf]
    %v950 = vld [vmem:[%s8 + $0x18] sm:$0xff]
    %v951 = vld [vmem:[%s8 + $0x20] sm:$0xf]
    %v952 = vld [vmem:[%s8 + $0x24] sm:$0xff]
    %v953 = vld [vmem:[%s8 + $0x2c] sm:$0xf]
    %v954 = vld [vmem:[%s8 + $0x30] sm:$0xff]
    %v955 = vld [vmem:[%s8 + $0x38] sm:$0xf]
    %v956 = vld [vmem:[%s8 + $0x3c] sm:$0xff]
    %v957 = vld [vmem:[%s8 + $0x44] sm:$0xf]
    %v958 = vld [vmem:[%s8 + $0x48] sm:$0xff]
    %v959 = vld [vmem:[%s8 + $0x50] sm:$0xf]
    %v960 = vld [vmem:[%s8 + $0x54] sm:$0xff]
    %v961 = vld [vmem:[%s8 + $0x5c] sm:$0xf]
    %v962 = vld [vmem:[%s8 + $0x60] sm:$0xff]
    %v963 = vld [vmem:[%s8 + $0x68] sm:$0xf]
    %v964 = vld [vmem:[%s8 + $0x6c] sm:$0xff]
    %v965 = vld [vmem:[%s8 + $0x74] sm:$0xf]
    %v966 = vld [vmem:[%s8 + $0x78] sm:$0xff]
    %v967 = vld [vmem:[%s8 + $0x80] sm:$0xf]
    %v968 = vld [vmem:[%s8 + $0x84] sm:$0xff]
    %v969 = vld [vmem:[%s8 + $0x8c] sm:$0xf]
    %v970 = vld [vmem:[%s8 + $0x90] sm:$0xff]
    %v971 = vld [vmem:[%s8 + $0x98] sm:$0xf]
    %v972 = vld [vmem:[%s8 + $0x9c] sm:$0xff]
    %v973 = vld [vmem:[%s8 + $0xa4] sm:$0xf]
    %v974 = vld [vmem:[%s8 + $0xa8] sm:$0xff]
    %v975 = vld [vmem:[%s8 + $0xb0] sm:$0xf]
    %v976 = vld [vmem:[%s8 + $0xb4] sm:$0xff]
    %v977 = vld [vmem:[%s8 + $0xbc] sm:$0xf]
    %v1010 = vunpack.c.l.b16 %v946
    %v1011 = vunpack.c.h.b16 %v946
    %v1012 = vunpack.c.l.b16 %v947
    %v1013 = vunpack.c.l.b16 %v948
    %v1014 = vunpack.c.h.b16 %v948
    %v1015 = vunpack.c.l.b16 %v949
    %v1016 = vunpack.c.l.b16 %v950
    %v1017 = vunpack.c.h.b16 %v950
    %v1018 = vunpack.c.l.b16 %v951
    %v1019 = vunpack.c.l.b16 %v952
    %v1020 = vunpack.c.h.b16 %v952
    %v1021 = vunpack.c.l.b16 %v953
    %v1022 = vunpack.c.l.b16 %v954
    %v1023 = vunpack.c.h.b16 %v954
    %v1024 = vunpack.c.l.b16 %v955
    %v1025 = vunpack.c.l.b16 %v956
    %v1026 = vunpack.c.h.b16 %v956
    %v1027 = vunpack.c.l.b16 %v957
    %v1028 = vunpack.c.l.b16 %v958
    %v1029 = vunpack.c.h.b16 %v958
    %v1030 = vunpack.c.l.b16 %v959
    %v1031 = vunpack.c.l.b16 %v960
    %v1032 = vunpack.c.h.b16 %v960
    %v1033 = vunpack.c.l.b16 %v961
    %v1034 = vunpack.c.l.b16 %v962
    %v1035 = vunpack.c.h.b16 %v962
    %v1036 = vunpack.c.l.b16 %v963
    %v1037 = vunpack.c.l.b16 %v964
    %v1038 = vunpack.c.h.b16 %v964
    %v1039 = vunpack.c.l.b16 %v965
    %v1040 = vunpack.c.l.b16 %v966
    %v1041 = vunpack.c.h.b16 %v966
    %v1042 = vunpack.c.l.b16 %v967
    %v1043 = vunpack.c.l.b16 %v968
    %v1044 = vunpack.c.h.b16 %v968
    %v1045 = vunpack.c.l.b16 %v969
    %v1046 = vunpack.c.l.b16 %v970
    %v1047 = vunpack.c.h.b16 %v970
    %v1048 = vunpack.c.l.b16 %v971
    %v1049 = vunpack.c.l.b16 %v972
    %v1050 = vunpack.c.h.b16 %v972
    %v1051 = vunpack.c.l.b16 %v973
    %v1052 = vunpack.c.l.b16 %v974
    %v1053 = vunpack.c.h.b16 %v974
    %v1054 = vunpack.c.l.b16 %v975
    %v1055 = vunpack.c.l.b16 %v976
    %v1056 = vunpack.c.h.b16 %v976
    %v1057 = vunpack.c.l.b16 %v977
    %v1058 = vpack.c.b16 %v1013, %v1010
    %v1059 = vpack.c.b16 %v1014, %v1011
    %v1060 = vpack.c.b16 %v1015, %v1012
    %v1061 = vpack.c.b16 %v1019, %v1016
    %v1062 = vpack.c.b16 %v1020, %v1017
    %v1063 = vpack.c.b16 %v1021, %v1018
    %v1064 = vpack.c.b16 %v1025, %v1022
    %v1065 = vpack.c.b16 %v1026, %v1023
    %v1066 = vpack.c.b16 %v1027, %v1024
    %v1067 = vpack.c.b16 %v1031, %v1028
    %v1068 = vpack.c.b16 %v1032, %v1029
    %v1069 = vpack.c.b16 %v1033, %v1030
    %v1070 = vpack.c.b16 %v1037, %v1034
    %v1071 = vpack.c.b16 %v1038, %v1035
    %v1072 = vpack.c.b16 %v1039, %v1036
    %v1073 = vpack.c.b16 %v1043, %v1040
    %v1074 = vpack.c.b16 %v1044, %v1041
    %v1075 = vpack.c.b16 %v1045, %v1042
    %v1076 = vpack.c.b16 %v1049, %v1046
    %v1077 = vpack.c.b16 %v1050, %v1047
    %v1078 = vpack.c.b16 %v1051, %v1048
    %v1079 = vpack.c.b16 %v1055, %v1052
    %v1080 = vpack.c.b16 %v1056, %v1053
    %v1081 = vpack.c.b16 %v1057, %v1054
    %1106 = vmatprep.subr.bf16.mxu0 %v1080
    %1107 = vmatpush1.bf16.msra.mxu0 %v1079
    %1108 = vmatprep.subr.bf16.mxu0 %v1077
    %1109 = vmatpush1.bf16.msra.mxu0 %v1076
    %1110 = vmatprep.subr.bf16.mxu0 %v1074
    %1111 = vmatpush1.bf16.msra.mxu0 %v1073
    %1112 = vmatprep.subr.bf16.mxu0 %v1071
    %1113 = vmatpush1.bf16.msra.mxu0 %v1070
    %1114 = vmatprep.subr.bf16.mxu0 %v1068
    %1115 = vmatpush1.bf16.msra.mxu0 %v1067
    %1116 = vmatprep.subr.bf16.mxu0 %v1065
    %1117 = vmatpush1.bf16.msra.mxu0 %v1064
    %1118 = vmatprep.subr.bf16.mxu0 %v1062
    %1119 = vmatpush1.bf16.msra.mxu0 %v1061
    %1120 = vmatprep.subr.bf16.mxu0 %v1059
    %1121 = vmatpush1.bf16.msra.mxu0 %v1058
    %1122 = vmatprep.subr.bf16.mxu0 0
    %1123 = vmatpush2.bf16.msra.mxu0 0
    %1124 = vmatprep.subr.bf16.mxu0 0
    %1125 = vmatpush2.bf16.msra.mxu0 0
    %1126 = vmatprep.subr.bf16.mxu0 0
    %1127 = vmatpush2.bf16.msra.mxu0 0
    %1128 = vmatprep.subr.bf16.mxu0 0
    %1129 = vmatpush2.bf16.msra.mxu0 0
    %1130 = vmatprep.subr.bf16.mxu0 0
    %1131 = vmatpush2.bf16.msra.mxu0 0
    %1132 = vmatprep.subr.bf16.mxu0 0
    %1133 = vmatpush2.bf16.msra.mxu0 0
    %1134 = vmatprep.subr.bf16.mxu0 0
    %1135 = vmatpush2.bf16.msra.mxu0 0
    %1136 = vmatprep.subr.bf16.mxu0 0
    %1137 = vmatpush2.bf16.msra.mxu0 0
    %1138 = vmatprep.mubr.bf16.mxu0 0
    %1139 = vmatmul.mubr.bf16.gmra.mxu0 %v944
    %v1140 = vpop.f32.mrf.mxu0
    %v1141 = vadd.f32 0.0, %v1140
    %v1142 = vpop.f32.mrf.mxu0
    %v1143 = vadd.f32 0.0, %v1142
    %v1144 = vpop.f32.mrf.mxu0
    %v1145 = vadd.f32 0.0, %v1144
    %v1146 = vpop.f32.mrf.mxu0
    %v1147 = vadd.f32 0.0, %v1146
    %1148 = vmatprep.mubr.bf16.mxu0 0
    %1149 = vmatmul.mubr.bf16.gmra.mxu0 %v945
    %v1150 = vpop.f32.mrf.mxu0
    %v1151 = vadd.f32 0.0, %v1150
    %v1152 = vpop.f32.mrf.mxu0
    %v1153 = vadd.f32 0.0, %v1152
    %v1154 = vpop.f32.mrf.mxu0
    %v1155 = vadd.f32 0.0, %v1154
    %v1156 = vpop.f32.mrf.mxu0
    %v1157 = vadd.f32 0.0, %v1156
    %1158 = vdwg.mxu0
    %1159 = vmatprep.subr.bf16.mxu0 0
    %1160 = vmatpush1.bf16.msra.mxu0 %v1081
    %1161 = vmatprep.subr.bf16.mxu0 0
    %1162 = vmatpush1.bf16.msra.mxu0 %v1078
    %1163 = vmatprep.subr.bf16.mxu0 0
    %1164 = vmatpush1.bf16.msra.mxu0 %v1075
    %1165 = vmatprep.subr.bf16.mxu0 0
    %1166 = vmatpush1.bf16.msra.mxu0 %v1072
    %1167 = vmatprep.subr.bf16.mxu0 0
    %1168 = vmatpush1.bf16.msra.mxu0 %v1069
    %1169 = vmatprep.subr.bf16.mxu0 0
    %1170 = vmatpush1.bf16.msra.mxu0 %v1066
    %1171 = vmatprep.subr.bf16.mxu0 0
    %1172 = vmatpush1.bf16.msra.mxu0 %v1063
    %1173 = vmatprep.subr.bf16.mxu0 0
    %1174 = vmatpush1.bf16.msra.mxu0 %v1060
    %1175 = vmatprep.subr.bf16.mxu0 0
    %1176 = vmatpush2.bf16.msra.mxu0 0
    %1177 = vmatprep.subr.bf16.mxu0 0
    %1178 = vmatpush2.bf16.msra.mxu0 0
    %1179 = vmatprep.subr.bf16.mxu0 0
    %1180 = vmatpush2.bf16.msra.mxu0 0
    %1181 = vmatprep.subr.bf16.mxu0 0
    %1182 = vmatpush2.bf16.msra.mxu0 0
    %1183 = vmatprep.subr.bf16.mxu0 0
    %1184 = vmatpush2.bf16.msra.mxu0 0
    %1185 = vmatprep.subr.bf16.mxu0 0
    %1186 = vmatpush2.bf16.msra.mxu0 0
    %1187 = vmatprep.subr.bf16.mxu0 0
    %1188 = vmatpush2.bf16.msra.mxu0 0
    %1189 = vmatprep.subr.bf16.mxu0 0
    %1190 = vmatpush2.bf16.msra.mxu0 0
    %1191 = vmatprep.mubr.bf16.mxu0 0
    %1192 = vmatmul.mubr.bf16.gmra.mxu0 %v944
    %v1193 = vpop.f32.mrf.mxu0
    %v1194 = vadd.f32 0.0, %v1193
    %v1195 = vpop.f32.mrf.mxu0
    %v1196 = vpop.f32.mrf.mxu0
    %v1197 = vadd.f32 0.0, %v1196
    %v1198 = vpop.f32.mrf.mxu0
    %1199 = vmatprep.mubr.bf16.mxu0 0
    %1200 = vmatmul.mubr.bf16.gmra.mxu0 %v945
    %v1201 = vpop.f32.mrf.mxu0
    %v1202 = vadd.f32 0.0, %v1201
    %v1203 = vpop.f32.mrf.mxu0
    %v1204 = vpop.f32.mrf.mxu0
    %v1205 = vadd.f32 0.0, %v1204
    %v1206 = vpop.f32.mrf.mxu0
    %1207 = vdwg.mxu0
    %v1208 = vpack.c.bf16 %v1145, %v1141
    %v1209 = vpack.c.bf16 %v1155, %v1151
    %v1210 = vpack.c.bf16 %v1147, %v1143
    %v1211 = vpack.c.bf16 %v1157, %v1153
    %v1212 = vpack.c.bf16 %v1197, %v1194
    %v1213 = vpack.c.bf16 %v1205, %v1202
    %v1214 = vld [vmem:[%s9] sm:$0xf]
    %v1215 = vld [vmem:[%s9 + $0x4] sm:$0xf]
    %v1216 = vld [vmem:[%s10] sm:$0x1]
    %v1218 = vlaneseq
    %v1219 = vshrl.u32 %v1218, 7
    %v1220 = vsub.s32 0, %v1219
    %v1221 = vrot.slane %v1216, %v1220
    %v1225 = vunpack.c.l.b16 %v1214
    %v1226 = vunpack.c.l.b16 %v1215
    %v1227 = vpack.c.b16 %v1226, %v1225
    %vm1228 = vcmask 785408
    %v1230 = vsel %vm1228, %v1227, 0
    %1232 = vmatprep.subr.bf16.mxu0 0
    %1233 = vmatpush1.bf16.msra.mxu0 0
    %1234 = vmatprep.subr.bf16.mxu0 0
    %1235 = vmatpush1.bf16.msra.mxu0 0
    %1236 = vmatprep.subr.bf16.mxu0 0
    %1237 = vmatpush1.bf16.msra.mxu0 %v1213
    %1238 = vmatprep.subr.bf16.mxu0 0
    %1239 = vmatpush1.bf16.msra.mxu0 %v1212
    %1240 = vmatprep.subr.bf16.mxu0 0
    %1241 = vmatpush1.bf16.msra.mxu0 %v1211
    %1242 = vmatprep.subr.bf16.mxu0 0
    %1243 = vmatpush1.bf16.msra.mxu0 %v1210
    %1244 = vmatprep.subr.bf16.mxu0 0
    %1245 = vmatpush1.bf16.msra.mxu0 %v1209
    %1246 = vmatprep.subr.bf16.mxu0 0
    %1247 = vmatpush1.bf16.msra.mxu0 %v1208
    %1248 = vmatprep.subr.bf16.mxu0 0
    %1249 = vmatpush2.bf16.msra.mxu0 0
    %1250 = vmatprep.subr.bf16.mxu0 0
    %1251 = vmatpush2.bf16.msra.mxu0 0
    %1252 = vmatprep.subr.bf16.mxu0 0
    %1253 = vmatpush2.bf16.msra.mxu0 0
    %1254 = vmatprep.subr.bf16.mxu0 0
    %1255 = vmatpush2.bf16.msra.mxu0 0
    %1256 = vmatprep.subr.bf16.mxu0 0
    %1257 = vmatpush2.bf16.msra.mxu0 0
    %1258 = vmatprep.subr.bf16.mxu0 0
    %1259 = vmatpush2.bf16.msra.mxu0 0
    %1260 = vmatprep.subr.bf16.mxu0 0
    %1261 = vmatpush2.bf16.msra.mxu0 0
    %1262 = vmatprep.subr.bf16.mxu0 0
    %1263 = vmatpush2.bf16.msra.mxu0 0
    %1264 = vmatprep.mubr.bf16.mxu0 0
    %1265 = vmatmul.mubr.bf16.gmra.mxu0 %v1230
    %v1266 = vpop.f32.mrf.mxu0
    %v1267 = vadd.f32 %v1221, %v1266
    %v1268 = vpop.f32.mrf.mxu0
    %v1269 = vpop.f32.mrf.mxu0
    %v1270 = vadd.f32 %v1221, %v1269
    %v1271 = vpop.f32.mrf.mxu0
    %1272 = vdwg.mxu0
    %v1273 = vmul.f32 %v1267, %v1267
    %v1274 = vmul.f32 %v1270, %v1270
    %v1275 = vmul.f32 %v1267, %v1273
    %v1276 = vmul.f32 %v1270, %v1274
    %v1277 = vmul.f32 %v1275, 0.044715
    %v1278 = vmul.f32 %v1276, 0.044715
    %v1279 = vadd.f32 %v1267, %v1277
    %v1280 = vadd.f32 %v1270, %v1278
    %v1281 = vmul.f32 %v1279, 0.7978846
    %v1282 = vmul.f32 %v1280, 0.7978846
    %v1283 = vtanh.pop %v1281
    %v1284 = vtanh.pop %v1282
    %v1285 = vadd.f32 %v1283, 1.0
    %v1286 = vadd.f32 %v1284, 1.0
    %v1287 = vmul.f32 %v1285, 0.5
    %v1288 = vmul.f32 %v1286, 0.5
    %v1289 = vmul.f32 %v1267, %v1287
    %v1290 = vmul.f32 %v1270, %v1288
    %v1291 = vpack.c.bf16 %v1290, %v1289
    %v1292 = vld [vmem:[%s11] sm:$0xff]
    %v1293 = vld [vmem:[%s11 + $0x8] sm:$0xf]
    %v1294 = vld [vmem:[%s11 + $0xc] sm:$0xff]
    %v1295 = vld [vmem:[%s11 + $0x14] sm:$0xf]
    %v1296 = vld [vmem:[%s11 + $0x18] sm:$0xff]
    %v1297 = vld [vmem:[%s11 + $0x20] sm:$0xf]
    %v1298 = vld [vmem:[%s11 + $0x24] sm:$0xff]
    %v1299 = vld [vmem:[%s11 + $0x2c] sm:$0xf]
    %v1300 = vld [vmem:[%s11 + $0x30] sm:$0xff]
    %v1301 = vld [vmem:[%s11 + $0x38] sm:$0xf]
    %v1302 = vld [vmem:[%s11 + $0x3c] sm:$0xff]
    %v1303 = vld [vmem:[%s11 + $0x44] sm:$0xf]
    %v1304 = vld [vmem:[%s11 + $0x48] sm:$0xff]
    %v1305 = vld [vmem:[%s11 + $0x50] sm:$0xf]
    %v1306 = vld [vmem:[%s11 + $0x54] sm:$0xff]
    %v1307 = vld [vmem:[%s11 + $0x5c] sm:$0xf]
    %v1308 = vld [vmem:[%s11 + $0x60] sm:$0xff]
    %v1309 = vld [vmem:[%s11 + $0x68] sm:$0xf]
    %v1310 = vld [vmem:[%s11 + $0x6c] sm:$0xff]
    %v1311 = vld [vmem:[%s11 + $0x74] sm:$0xf]
    %v1312 = vld [vmem:[%s11 + $0x78] sm:$0xff]
    %v1313 = vld [vmem:[%s11 + $0x80] sm:$0xf]
    %v1314 = vld [vmem:[%s11 + $0x84] sm:$0xff]
    %v1315 = vld [vmem:[%s11 + $0x8c] sm:$0xf]
    %v1316 = vld [vmem:[%s11 + $0x90] sm:$0xff]
    %v1317 = vld [vmem:[%s11 + $0x98] sm:$0xf]
    %v1318 = vld [vmem:[%s11 + $0x9c] sm:$0xff]
    %v1319 = vld [vmem:[%s11 + $0xa4] sm:$0xf]
    %v1320 = vld [vmem:[%s11 + $0xa8] sm:$0xff]
    %v1321 = vld [vmem:[%s11 + $0xb0] sm:$0xf]
    %v1322 = vld [vmem:[%s11 + $0xb4] sm:$0xff]
    %v1323 = vld [vmem:[%s11 + $0xbc] sm:$0xf]
    %v1356 = vunpack.c.l.b16 %v1292
    %v1357 = vunpack.c.h.b16 %v1292
    %v1358 = vunpack.c.l.b16 %v1293
    %v1359 = vunpack.c.l.b16 %v1294
    %v1360 = vunpack.c.h.b16 %v1294
    %v1361 = vunpack.c.l.b16 %v1295
    %v1362 = vunpack.c.l.b16 %v1296
    %v1363 = vunpack.c.h.b16 %v1296
    %v1364 = vunpack.c.l.b16 %v1297
    %v1365 = vunpack.c.l.b16 %v1298
    %v1366 = vunpack.c.h.b16 %v1298
    %v1367 = vunpack.c.l.b16 %v1299
    %v1368 = vunpack.c.l.b16 %v1300
    %v1369 = vunpack.c.h.b16 %v1300
    %v1370 = vunpack.c.l.b16 %v1301
    %v1371 = vunpack.c.l.b16 %v1302
    %v1372 = vunpack.c.h.b16 %v1302
    %v1373 = vunpack.c.l.b16 %v1303
    %v1374 = vunpack.c.l.b16 %v1304
    %v1375 = vunpack.c.h.b16 %v1304
    %v1376 = vunpack.c.l.b16 %v1305
    %v1377 = vunpack.c.l.b16 %v1306
    %v1378 = vunpack.c.h.b16 %v1306
    %v1379 = vunpack.c.l.b16 %v1307
    %v1380 = vunpack.c.l.b16 %v1308
    %v1381 = vunpack.c.h.b16 %v1308
    %v1382 = vunpack.c.l.b16 %v1309
    %v1383 = vunpack.c.l.b16 %v1310
    %v1384 = vunpack.c.h.b16 %v1310
    %v1385 = vunpack.c.l.b16 %v1311
    %v1386 = vunpack.c.l.b16 %v1312
    %v1387 = vunpack.c.h.b16 %v1312
    %v1388 = vunpack.c.l.b16 %v1313
    %v1389 = vunpack.c.l.b16 %v1314
    %v1390 = vunpack.c.h.b16 %v1314
    %v1391 = vunpack.c.l.b16 %v1315
    %v1392 = vunpack.c.l.b16 %v1316
    %v1393 = vunpack.c.h.b16 %v1316
    %v1394 = vunpack.c.l.b16 %v1317
    %v1395 = vunpack.c.l.b16 %v1318
    %v1396 = vunpack.c.h.b16 %v1318
    %v1397 = vunpack.c.l.b16 %v1319
    %v1398 = vunpack.c.l.b16 %v1320
    %v1399 = vunpack.c.h.b16 %v1320
    %v1400 = vunpack.c.l.b16 %v1321
    %v1401 = vunpack.c.l.b16 %v1322
    %v1402 = vunpack.c.h.b16 %v1322
    %v1403 = vunpack.c.l.b16 %v1323
    %v1404 = vpack.c.b16 %v1359, %v1356
    %v1405 = vpack.c.b16 %v1360, %v1357
    %v1406 = vpack.c.b16 %v1361, %v1358
    %v1407 = vpack.c.b16 %v1365, %v1362
    %v1408 = vpack.c.b16 %v1366, %v1363
    %v1409 = vpack.c.b16 %v1367, %v1364
    %v1410 = vpack.c.b16 %v1371, %v1368
    %v1411 = vpack.c.b16 %v1372, %v1369
    %v1412 = vpack.c.b16 %v1373, %v1370
    %v1413 = vpack.c.b16 %v1377, %v1374
    %v1414 = vpack.c.b16 %v1378, %v1375
    %v1415 = vpack.c.b16 %v1379, %v1376
    %v1416 = vpack.c.b16 %v1383, %v1380
    %v1417 = vpack.c.b16 %v1384, %v1381
    %v1418 = vpack.c.b16 %v1385, %v1382
    %v1419 = vpack.c.b16 %v1389, %v1386
    %v1420 = vpack.c.b16 %v1390, %v1387
    %v1421 = vpack.c.b16 %v1391, %v1388
    %v1422 = vpack.c.b16 %v1395, %v1392
    %v1423 = vpack.c.b16 %v1396, %v1393
    %v1424 = vpack.c.b16 %v1397, %v1394
    %v1425 = vpack.c.b16 %v1401, %v1398
    %v1426 = vpack.c.b16 %v1402, %v1399
    %v1427 = vpack.c.b16 %v1403, %v1400
    %1452 = vmatprep.subr.bf16.mxu0 %v1426
    %1453 = vmatpush1.bf16.msra.mxu0 %v1425
    %1454 = vmatprep.subr.bf16.mxu0 %v1423
    %1455 = vmatpush1.bf16.msra.mxu0 %v1422
    %1456 = vmatprep.subr.bf16.mxu0 %v1420
    %1457 = vmatpush1.bf16.msra.mxu0 %v1419
    %1458 = vmatprep.subr.bf16.mxu0 %v1417
    %1459 = vmatpush1.bf16.msra.mxu0 %v1416
    %1460 = vmatprep.subr.bf16.mxu0 %v1414
    %1461 = vmatpush1.bf16.msra.mxu0 %v1413
    %1462 = vmatprep.subr.bf16.mxu0 %v1411
    %1463 = vmatpush1.bf16.msra.mxu0 %v1410
    %1464 = vmatprep.subr.bf16.mxu0 %v1408
    %1465 = vmatpush1.bf16.msra.mxu0 %v1407
    %1466 = vmatprep.subr.bf16.mxu0 %v1405
    %1467 = vmatpush1.bf16.msra.mxu0 %v1404
    %1468 = vmatprep.subr.bf16.mxu0 0
    %1469 = vmatpush2.bf16.msra.mxu0 0
    %1470 = vmatprep.subr.bf16.mxu0 0
    %1471 = vmatpush2.bf16.msra.mxu0 0
    %1472 = vmatprep.subr.bf16.mxu0 0
    %1473 = vmatpush2.bf16.msra.mxu0 0
    %1474 = vmatprep.subr.bf16.mxu0 0
    %1475 = vmatpush2.bf16.msra.mxu0 0
    %1476 = vmatprep.subr.bf16.mxu0 0
    %1477 = vmatpush2.bf16.msra.mxu0 0
    %1478 = vmatprep.subr.bf16.mxu0 0
    %1479 = vmatpush2.bf16.msra.mxu0 0
    %1480 = vmatprep.subr.bf16.mxu0 0
    %1481 = vmatpush2.bf16.msra.mxu0 0
    %1482 = vmatprep.subr.bf16.mxu0 0
    %1483 = vmatpush2.bf16.msra.mxu0 0
    %1484 = vmatprep.mubr.bf16.mxu0 0
    %1485 = vmatmul.mubr.bf16.gmra.mxu0 %v1291
    %v1486 = vpop.f32.mrf.mxu0
    %v1487 = vadd.f32 0.0, %v1486
    %v1488 = vpop.f32.mrf.mxu0
    %v1489 = vadd.f32 0.0, %v1488
    %v1490 = vpop.f32.mrf.mxu0
    %v1491 = vadd.f32 0.0, %v1490
    %v1492 = vpop.f32.mrf.mxu0
    %v1493 = vadd.f32 0.0, %v1492
    %1494 = vdwg.mxu0
    %1495 = vmatprep.subr.bf16.mxu0 0
    %1496 = vmatpush1.bf16.msra.mxu0 %v1427
    %1497 = vmatprep.subr.bf16.mxu0 0
    %1498 = vmatpush1.bf16.msra.mxu0 %v1424
    %1499 = vmatprep.subr.bf16.mxu0 0
    %1500 = vmatpush1.bf16.msra.mxu0 %v1421
    %1501 = vmatprep.subr.bf16.mxu0 0
    %1502 = vmatpush1.bf16.msra.mxu0 %v1418
    %1503 = vmatprep.subr.bf16.mxu0 0
    %1504 = vmatpush1.bf16.msra.mxu0 %v1415
    %1505 = vmatprep.subr.bf16.mxu0 0
    %1506 = vmatpush1.bf16.msra.mxu0 %v1412
    %1507 = vmatprep.subr.bf16.mxu0 0
    %1508 = vmatpush1.bf16.msra.mxu0 %v1409
    %1509 = vmatprep.subr.bf16.mxu0 0
    %1510 = vmatpush1.bf16.msra.mxu0 %v1406
    %1511 = vmatprep.subr.bf16.mxu0 0
    %1512 = vmatpush2.bf16.msra.mxu0 0
    %1513 = vmatprep.subr.bf16.mxu0 0
    %1514 = vmatpush2.bf16.msra.mxu0 0
    %1515 = vmatprep.subr.bf16.mxu0 0
    %1516 = vmatpush2.bf16.msra.mxu0 0
    %1517 = vmatprep.subr.bf16.mxu0 0
    %1518 = vmatpush2.bf16.msra.mxu0 0
    %1519 = vmatprep.subr.bf16.mxu0 0
    %1520 = vmatpush2.bf16.msra.mxu0 0
    %1521 = vmatprep.subr.bf16.mxu0 0
    %1522 = vmatpush2.bf16.msra.mxu0 0
    %1523 = vmatprep.subr.bf16.mxu0 0
    %1524 = vmatpush2.bf16.msra.mxu0 0
    %1525 = vmatprep.subr.bf16.mxu0 0
    %1526 = vmatpush2.bf16.msra.mxu0 0
    %1527 = vmatprep.mubr.bf16.mxu0 0
    %1528 = vmatmul.mubr.bf16.gmra.mxu0 %v1291
    %v1529 = vpop.f32.mrf.mxu0
    %v1530 = vadd.f32 0.0, %v1529
    %v1531 = vpop.f32.mrf.mxu0
    %v1532 = vpop.f32.mrf.mxu0
    %v1533 = vadd.f32 0.0, %v1532
    %v1534 = vpop.f32.mrf.mxu0
    %1535 = vdwg.mxu0
    %v1537 = vrot.slane %v1491, 7
    %v1540 = vrot.slane %v1487, 7
    %v1541 = vsel %vm803, %v1540, %v1537
    %v1544 = vsel %vm803, %v1537, %v1540
    %v1547 = vrot.slane %v1530, 1
    %v1548 = vrot.slane %v1533, 1
    %v1549 = vsel %vm819, %v1547, %v1548
    %v1553 = vsel %vm819, %v1548, %v1547
    %v1554 = vld [vmem:[%s12] sm:$0xff]
    %v1555 = vld [vmem:[%s12 + $0x8] sm:$0xff]
    %1557 = vset.pattern.permute.xlu0 0
    %1558 = vperm.xlu0 %1557, %v1554
    %v1559 = vpop.permute.xlu0 %1558
    %1562 = vset.pattern.permute.xlu0 0
    %1563 = vperm.xlu0 %1562, %v1555
    %v1564 = vpop.permute.xlu0 %1563
    %v1566 = vmul.f32 %v1544, %v1559
    %v1567 = vmul.f32 %v1541, %v1564
    %v1568 = vadd.f32 %v1566, %v1489
    %v1569 = vadd.f32 %v1567, %v1493
    %v1570 = vld [vmem:[%s13] sm:$0xff]
    %v1571 = vld [vmem:[%s13 + $0x8] sm:$0xff]
    %1573 = vset.pattern.permute.xlu0 0
    %1574 = vperm.xlu0 %1573, %v1570
    %v1575 = vpop.permute.xlu0 %1574
    %1578 = vset.pattern.permute.xlu0 0
    %1579 = vperm.xlu0 %1578, %v1571
    %v1580 = vpop.permute.xlu0 %1579
    %v1582 = vmul.f32 %v1549, %v1575
    %v1583 = vmul.f32 %v1553, %v1580
    %v1584 = vadd.f32 %v1568, %v1582
    %v1585 = vadd.f32 %v1569, %v1583
    %v1586 = vld [vmem:[%s14] sm:$0x1]
    %v1588 = vlaneseq
    %v1589 = vshrl.u32 %v1588, 7
    %v1590 = vsub.s32 0, %v1589
    %v1591 = vrot.slane %v1586, %v1590
    %v1593 = vadd.f32 %v1584, %v1591
    %v1594 = vadd.f32 %v1585, %v1591
    %v1595 = vmul.f32 %v1593, %v1593
    %v1596 = vmul.f32 %v1594, %v1594
    %v1597 = vmul.f32 %v1593, %v1595
    %v1598 = vmul.f32 %v1594, %v1596
    %v1599 = vmul.f32 %v1597, 0.044715
    %v1600 = vmul.f32 %v1598, 0.044715
    %v1601 = vadd.f32 %v1593, %v1599
    %v1602 = vadd.f32 %v1594, %v1600
    %v1603 = vmul.f32 %v1601, 0.7978846
    %v1604 = vmul.f32 %v1602, 0.7978846
    %v1605 = vtanh.pop %v1603
    %v1606 = vtanh.pop %v1604
    %v1607 = vadd.f32 %v1605, 1.0
    %v1608 = vadd.f32 %v1606, 1.0
    %v1609 = vmul.f32 %v1607, 0.5
    %v1610 = vmul.f32 %v1608, 0.5
    %v1611 = vmul.f32 %v1593, %v1609
    %v1612 = vmul.f32 %v1594, %v1610
    %v1613 = vpack.c.bf16 %v1612, %v1611
    %v1614 = vld [vmem:[%s15] sm:$0xff]
    %v1615 = vld [vmem:[%s15 + $0x8] sm:$0xff]
    %v1616 = vld [vmem:[%s15 + $0x10] sm:$0xff]
    %v1617 = vld [vmem:[%s15 + $0x18] sm:$0xff]
    %v1618 = vld [vmem:[%s15 + $0x20] sm:$0xff]
    %v1619 = vld [vmem:[%s15 + $0x28] sm:$0xff]
    %v1620 = vld [vmem:[%s15 + $0x30] sm:$0xff]
    %v1621 = vld [vmem:[%s15 + $0x38] sm:$0xff]
    %v1622 = vld [vmem:[%s15 + $0x40] sm:$0xff]
    %v1623 = vld [vmem:[%s15 + $0x48] sm:$0xff]
    %v1624 = vld [vmem:[%s15 + $0x50] sm:$0xff]
    %v1625 = vld [vmem:[%s15 + $0x58] sm:$0xff]
    %v1626 = vld [vmem:[%s15 + $0x60] sm:$0xff]
    %v1627 = vld [vmem:[%s15 + $0x68] sm:$0xff]
    %v1628 = vld [vmem:[%s15 + $0x70] sm:$0xff]
    %v1629 = vld [vmem:[%s15 + $0x78] sm:$0xff]
    %v1646 = vunpack.c.l.b16 %v1614
    %v1647 = vunpack.c.h.b16 %v1614
    %v1648 = vunpack.c.l.b16 %v1615
    %v1649 = vunpack.c.h.b16 %v1615
    %v1650 = vunpack.c.l.b16 %v1616
    %v1651 = vunpack.c.h.b16 %v1616
    %v1652 = vunpack.c.l.b16 %v1617
    %v1653 = vunpack.c.h.b16 %v1617
    %v1654 = vunpack.c.l.b16 %v1618
    %v1655 = vunpack.c.h.b16 %v1618
    %v1656 = vunpack.c.l.b16 %v1619
    %v1657 = vunpack.c.h.b16 %v1619
    %v1658 = vunpack.c.l.b16 %v1620
    %v1659 = vunpack.c.h.b16 %v1620
    %v1660 = vunpack.c.l.b16 %v1621
    %v1661 = vunpack.c.h.b16 %v1621
    %v1662 = vunpack.c.l.b16 %v1622
    %v1663 = vunpack.c.h.b16 %v1622
    %v1664 = vunpack.c.l.b16 %v1623
    %v1665 = vunpack.c.h.b16 %v1623
    %v1666 = vunpack.c.l.b16 %v1624
    %v1667 = vunpack.c.h.b16 %v1624
    %v1668 = vunpack.c.l.b16 %v1625
    %v1669 = vunpack.c.h.b16 %v1625
    %v1670 = vunpack.c.l.b16 %v1626
    %v1671 = vunpack.c.h.b16 %v1626
    %v1672 = vunpack.c.l.b16 %v1627
    %v1673 = vunpack.c.h.b16 %v1627
    %v1674 = vunpack.c.l.b16 %v1628
    %v1675 = vunpack.c.h.b16 %v1628
    %v1676 = vunpack.c.l.b16 %v1629
    %v1677 = vunpack.c.h.b16 %v1629
    %v1678 = vpack.c.b16 %v1648, %v1646
    %v1679 = vpack.c.b16 %v1649, %v1647
    %v1680 = vpack.c.b16 %v1652, %v1650
    %v1681 = vpack.c.b16 %v1653, %v1651
    %v1682 = vpack.c.b16 %v1656, %v1654
    %v1683 = vpack.c.b16 %v1657, %v1655
    %v1684 = vpack.c.b16 %v1660, %v1658
    %v1685 = vpack.c.b16 %v1661, %v1659
    %v1686 = vpack.c.b16 %v1664, %v1662
    %v1687 = vpack.c.b16 %v1665, %v1663
    %v1688 = vpack.c.b16 %v1668, %v1666
    %v1689 = vpack.c.b16 %v1669, %v1667
    %v1690 = vpack.c.b16 %v1672, %v1670
    %v1691 = vpack.c.b16 %v1673, %v1671
    %v1692 = vpack.c.b16 %v1676, %v1674
    %v1693 = vpack.c.b16 %v1677, %v1675
    %1710 = vmatprep.subr.bf16.mxu0 %v1693
    %1711 = vmatpush1.bf16.msra.mxu0 %v1692
    %1712 = vmatprep.subr.bf16.mxu0 %v1691
    %1713 = vmatpush1.bf16.msra.mxu0 %v1690
    %1714 = vmatprep.subr.bf16.mxu0 %v1689
    %1715 = vmatpush1.bf16.msra.mxu0 %v1688
    %1716 = vmatprep.subr.bf16.mxu0 %v1687
    %1717 = vmatpush1.bf16.msra.mxu0 %v1686
    %1718 = vmatprep.subr.bf16.mxu0 %v1685
    %1719 = vmatpush1.bf16.msra.mxu0 %v1684
    %1720 = vmatprep.subr.bf16.mxu0 %v1683
    %1721 = vmatpush1.bf16.msra.mxu0 %v1682
    %1722 = vmatprep.subr.bf16.mxu0 %v1681
    %1723 = vmatpush1.bf16.msra.mxu0 %v1680
    %1724 = vmatprep.subr.bf16.mxu0 %v1679
    %1725 = vmatpush1.bf16.msra.mxu0 %v1678
    %1726 = vmatprep.subr.bf16.mxu0 0
    %1727 = vmatpush2.bf16.msra.mxu0 0
    %1728 = vmatprep.subr.bf16.mxu0 0
    %1729 = vmatpush2.bf16.msra.mxu0 0
    %1730 = vmatprep.subr.bf16.mxu0 0
    %1731 = vmatpush2.bf16.msra.mxu0 0
    %1732 = vmatprep.subr.bf16.mxu0 0
    %1733 = vmatpush2.bf16.msra.mxu0 0
    %1734 = vmatprep.subr.bf16.mxu0 0
    %1735 = vmatpush2.bf16.msra.mxu0 0
    %1736 = vmatprep.subr.bf16.mxu0 0
    %1737 = vmatpush2.bf16.msra.mxu0 0
    %1738 = vmatprep.subr.bf16.mxu0 0
    %1739 = vmatpush2.bf16.msra.mxu0 0
    %1740 = vmatprep.subr.bf16.mxu0 0
    %1741 = vmatpush2.bf16.msra.mxu0 0
    %1742 = vmatprep.mubr.bf16.mxu0 0
    %1743 = vmatmul.mubr.bf16.gmra.mxu0 %v1613
    %v1744 = vpop.f32.mrf.mxu0
    %v1745 = vadd.f32 0.0, %v1744
    %v1746 = vpop.f32.mrf.mxu0
    %v1747 = vadd.f32 0.0, %v1746
    %v1748 = vpop.f32.mrf.mxu0
    %v1749 = vadd.f32 0.0, %v1748
    %v1750 = vpop.f32.mrf.mxu0
    %v1751 = vadd.f32 0.0, %v1750
    %1752 = vdwg.mxu0
    %1755 = vrot.lane.b32.xlu0 %v1745, 64
    %v1756 = vpop.permute.xlu0 %1755
    %1757 = vrot.lane.b32.xlu0 %v1749, 64
    %v1758 = vpop.permute.xlu0 %1757
    %v1761 = vpack.c.bf16 %v1749, %v1745
    %v1762 = vpack.c.bf16 %v1758, %v1756
    %v1763 = vpack.c.bf16 %v1751, %v1747
    %v1764 = vld [vmem:[%s16] sm:$0xf]
    %v1765 = vld [vmem:[%s17] sm:$0x1]
    %v1767 = vlaneseq
    %v1768 = vshrl.u32 %v1767, 7
    %v1769 = vsub.s32 0, %v1768
    %v1770 = vrot.slane %v1765, %v1769
    %vm1772 = vcmask 392192
    %v1774 = vsel %vm1772, %v1764, 0
    %1776 = vmatprep.subr.bf16.mxu0 0
    %1777 = vmatpush1.bf16.msra.mxu0 0
    %1778 = vmatprep.subr.bf16.mxu0 0
    %1779 = vmatpush1.bf16.msra.mxu0 0
    %1780 = vmatprep.subr.bf16.mxu0 0
    %1781 = vmatpush1.bf16.msra.mxu0 0
    %1782 = vmatprep.subr.bf16.mxu0 0
    %1783 = vmatpush1.bf16.msra.mxu0 0
    %1784 = vmatprep.subr.bf16.mxu0 0
    %1785 = vmatpush1.bf16.msra.mxu0 0
    %1786 = vmatprep.subr.bf16.mxu0 0
    %1787 = vmatpush1.bf16.msra.mxu0 %v1763
    %1788 = vmatprep.subr.bf16.mxu0 0
    %1789 = vmatpush1.bf16.msra.mxu0 %v1762
    %1790 = vmatprep.subr.bf16.mxu0 0
    %1791 = vmatpush1.bf16.msra.mxu0 %v1761
    %1792 = vmatprep.subr.bf16.mxu0 0
    %1793 = vmatpush2.bf16.msra.mxu0 0
    %1794 = vmatprep.subr.bf16.mxu0 0
    %1795 = vmatpush2.bf16.msra.mxu0 0
    %1796 = vmatprep.subr.bf16.mxu0 0
    %1797 = vmatpush2.bf16.msra.mxu0 0
    %1798 = vmatprep.subr.bf16.mxu0 0
    %1799 = vmatpush2.bf16.msra.mxu0 0
    %1800 = vmatprep.subr.bf16.mxu0 0
    %1801 = vmatpush2.bf16.msra.mxu0 0
    %1802 = vmatprep.subr.bf16.mxu0 0
    %1803 = vmatpush2.bf16.msra.mxu0 0
    %1804 = vmatprep.subr.bf16.mxu0 0
    %1805 = vmatpush2.bf16.msra.mxu0 0
    %1806 = vmatprep.subr.bf16.mxu0 0
    %1807 = vmatpush2.bf16.msra.mxu0 0
    %1808 = vmatprep.mubr.bf16.mxu0 0
    %1809 = vmatmul.mubr.bf16.gmra.mxu0 %v1774
    %v1810 = vpop.f32.mrf.mxu0
    %v1811 = vadd.f32 %v1770, %v1810
    %v1812 = vpop.f32.mrf.mxu0
    %v1813 = vpop.f32.mrf.mxu0
    %v1814 = vpop.f32.mrf.mxu0
    %1815 = vdwg.mxu0
    %v1816 = vmul.f32 %v1811, %v1811
    %v1817 = vmul.f32 %v1811, %v1816
    %v1818 = vmul.f32 %v1817, 0.044715
    %v1819 = vadd.f32 %v1811, %v1818
    %v1820 = vmul.f32 %v1819, 0.7978846
    %v1821 = vtanh.pop %v1820
    %v1822 = vadd.f32 %v1821, 1.0
    %v1823 = vmul.f32 %v1822, 0.5
    %v1824 = vmul.f32 %v1811, %v1823
    %v1825 = vpack.c.bf16 %v1824, %v1824
    %v1826 = vld [vmem:[%s18] sm:$0xf]
    %v1827 = vld [vmem:[%s18 + $0x4] sm:$0xf]
    %v1828 = vld [vmem:[%s18 + $0x8] sm:$0xf]
    %v1829 = vld [vmem:[%s18 + $0xc] sm:$0xf]
    %v1830 = vld [vmem:[%s18 + $0x10] sm:$0xf]
    %v1831 = vld [vmem:[%s18 + $0x14] sm:$0xf]
    %v1832 = vld [vmem:[%s18 + $0x18] sm:$0xf]
    %v1833 = vld [vmem:[%s18 + $0x1c] sm:$0xf]
    %v1842 = vunpack.c.l.b16 %v1826
    %v1843 = vunpack.c.l.b16 %v1827
    %v1844 = vunpack.c.l.b16 %v1828
    %v1845 = vunpack.c.l.b16 %v1829
    %v1846 = vunpack.c.l.b16 %v1830
    %v1847 = vunpack.c.l.b16 %v1831
    %v1848 = vunpack.c.l.b16 %v1832
    %v1849 = vunpack.c.l.b16 %v1833
    %v1850 = vpack.c.b16 %v1843, %v1842
    %v1851 = vpack.c.b16 %v1845, %v1844
    %v1852 = vpack.c.b16 %v1847, %v1846
    %v1853 = vpack.c.b16 %v1849, %v1848
    %v1859 = vsel %vm441, %v1825, 0
    %1861 = vmatprep.subr.bf16.mxu0 0
    %1862 = vmatpush1.bf16.msra.mxu0 0
    %1863 = vmatprep.subr.bf16.mxu0 0
    %1864 = vmatpush1.bf16.msra.mxu0 0
    %1865 = vmatprep.subr.bf16.mxu0 0
    %1866 = vmatpush1.bf16.msra.mxu0 0
    %1867 = vmatprep.subr.bf16.mxu0 0
    %1868 = vmatpush1.bf16.msra.mxu0 0
    %1869 = vmatprep.subr.bf16.mxu0 0
    %1870 = vmatpush1.bf16.msra.mxu0 %v1853
    %1871 = vmatprep.subr.bf16.mxu0 0
    %1872 = vmatpush1.bf16.msra.mxu0 %v1852
    %1873 = vmatprep.subr.bf16.mxu0 0
    %1874 = vmatpush1.bf16.msra.mxu0 %v1851
    %1875 = vmatprep.subr.bf16.mxu0 0
    %1876 = vmatpush1.bf16.msra.mxu0 %v1850
    %1877 = vmatprep.subr.bf16.mxu0 0
    %1878 = vmatpush2.bf16.msra.mxu0 0
    %1879 = vmatprep.subr.bf16.mxu0 0
    %1880 = vmatpush2.bf16.msra.mxu0 0
    %1881 = vmatprep.subr.bf16.mxu0 0
    %1882 = vmatpush2.bf16.msra.mxu0 0
    %1883 = vmatprep.subr.bf16.mxu0 0
    %1884 = vmatpush2.bf16.msra.mxu0 0
    %1885 = vmatprep.subr.bf16.mxu0 0
    %1886 = vmatpush2.bf16.msra.mxu0 0
    %1887 = vmatprep.subr.bf16.mxu0 0
    %1888 = vmatpush2.bf16.msra.mxu0 0
    %1889 = vmatprep.subr.bf16.mxu0 0
    %1890 = vmatpush2.bf16.msra.mxu0 0
    %1891 = vmatprep.subr.bf16.mxu0 0
    %1892 = vmatpush2.bf16.msra.mxu0 0
    %1893 = vmatprep.mubr.bf16.mxu0 0
    %1894 = vmatmul.mubr.bf16.gmra.mxu0 %v1859
    %v1895 = vpop.f32.mrf.mxu0
    %v1896 = vadd.f32 0.0, %v1895
    %v1897 = vpop.f32.mrf.mxu0
    %v1898 = vpop.f32.mrf.mxu0
    %v1899 = vpop.f32.mrf.mxu0
    %1900 = vdwg.mxu0
    %1902 = vrot.lane.b32.xlu0 %v1896, 112
    %v1903 = vpop.permute.xlu0 %1902
    %1905 = vrot.lane.b32.xlu0 %v1896, 96
    %v1906 = vpop.permute.xlu0 %1905
    %1908 = vrot.lane.b32.xlu0 %v1896, 80
    %v1909 = vpop.permute.xlu0 %1908
    %v1911 = vpack.c.bf16 %v1903, %v1896
    %v1912 = vpack.c.bf16 %v1909, %v1906
    %v1913 = vld [vmem:[%s19] sm:$0x1]
    %v1914 = vld [vmem:[%s20] sm:$0x1]
    %v1916 = vlaneseq
    %v1917 = vshrl.u32 %v1916, 7
    %v1918 = vsub.s32 0, %v1917
    %v1919 = vrot.slane %v1914, %v1918
    %vm1921 = vcmask 261120
    %v1923 = vsel %vm1921, %v1913, 0
    %1925 = vmatprep.subr.bf16.mxu0 0
    %1926 = vmatpush1.bf16.msra.mxu0 0
    %1927 = vmatprep.subr.bf16.mxu0 0
    %1928 = vmatpush1.bf16.msra.mxu0 0
    %1929 = vmatprep.subr.bf16.mxu0 0
    %1930 = vmatpush1.bf16.msra.mxu0 0
    %1931 = vmatprep.subr.bf16.mxu0 0
    %1932 = vmatpush1.bf16.msra.mxu0 0
    %1933 = vmatprep.subr.bf16.mxu0 0
    %1934 = vmatpush1.bf16.msra.mxu0 0
    %1935 = vmatprep.subr.bf16.mxu0 0
    %1936 = vmatpush1.bf16.msra.mxu0 0
    %1937 = vmatprep.subr.bf16.mxu0 0
    %1938 = vmatpush1.bf16.msra.mxu0 %v1912
    %1939 = vmatprep.subr.bf16.mxu0 0
    %1940 = vmatpush1.bf16.msra.mxu0 %v1911
    %1941 = vmatprep.subr.bf16.mxu0 0
    %1942 = vmatpush2.bf16.msra.mxu0 0
    %1943 = vmatprep.subr.bf16.mxu0 0
    %1944 = vmatpush2.bf16.msra.mxu0 0
    %1945 = vmatprep.subr.bf16.mxu0 0
    %1946 = vmatpush2.bf16.msra.mxu0 0
    %1947 = vmatprep.subr.bf16.mxu0 0
    %1948 = vmatpush2.bf16.msra.mxu0 0
    %1949 = vmatprep.subr.bf16.mxu0 0
    %1950 = vmatpush2.bf16.msra.mxu0 0
    %1951 = vmatprep.subr.bf16.mxu0 0
    %1952 = vmatpush2.bf16.msra.mxu0 0
    %1953 = vmatprep.subr.bf16.mxu0 0
    %1954 = vmatpush2.bf16.msra.mxu0 0
    %1955 = vmatprep.subr.bf16.mxu0 0
    %1956 = vmatpush2.bf16.msra.mxu0 0
    %1957 = vmatprep.mubr.bf16.mxu0 0
    %1958 = vmatmul.mubr.bf16.gmra.mxu0 %v1923
    %v1959 = vpop.f32.mrf.mxu0
    %v1960 = vadd.f32 %v1919, %v1959
    %v1961 = vpop.f32.mrf.mxu0
    %v1962 = vpop.f32.mrf.mxu0
    %v1963 = vpop.f32.mrf.mxu0
    %1964 = vdwg.mxu0
    %vm1965 = vcmask 123904
    %1966 = vst.msk [vmem:[#allocation2] sm:$0x3] %vm1965, %v1960
    // Predicated region
    $region86: #{encoder_forward.1} parent=1 // pred_check
      _
    $region87: #{encoder_forward.1} parent=1 // pred_check_branch
      %1968 = sbr.rel (0) target = $region89
    $region88: #{encoder_forward.1} parent=1 // pred_region
      %s1970 = ssub.s32 32, 32
      %1971 = vsyncadd [#allocation3], %s1970
      %s1973 = sshll.u32 [#allocation2], 4
      %s1974 = int_to_ptr.vmem [resolvable:$true] %s1973
      %1976 = dma.vmem_to_hbm [thread:$0]  %s1974, 32, %s21, [#allocation3]
    $region89: #{encoder_forward.1} parent=1 // pred_fallthru
      _
    // Predicated region
    $region90: #{encoder_forward.1} parent=1 // pred_check
      _
    $region91: #{encoder_forward.1} parent=1 // pred_check_branch
      %1978 = sbr.rel (0) target = $region93
    $region92: #{encoder_forward.1} parent=1 // pred_region
      %1979 = dma.done [#allocation3], 32
    $region93: #{encoder_forward.1} parent=1 // pred_fallthru
      _
    %1980 = vsyncpa [#allocation3], 1

</llo_original>
